<compile_context>
chip_gen: v6e
topology: v6e:2x2x1
jax: 0.10.0
libtpu: 0.0.40
codegen_flags: <defaults>
</compile_context>

<pallas_src>
import jax
import jax.numpy as jnp
import numpy as np
from jax import lax
from jax.experimental import pallas as pl
from jax.experimental.pallas import tpu as pltpu

HIDDEN = 24
INPUT = 1
GATE_W = 4 * 128          # each of the 4 gates padded to its own 128-lane slab
_MAX_CHUNK = 256          # timesteps per grid step (keeps xb/h_all scratch ~5 MB)
_UNROLL = 16              # inner time-loop unroll factor


def _make_kernel(T, tc, ragged, unroll):
    H = HIDDEN

    def kernel(x_ref, w_hh_ref, wb_ref, wlin_ref, h0_ref, c0_ref,
               y_ref, hn_ref, cn_ref,
               xb_ref, hall_ref, h_vmem, c_vmem):
        chunk = pl.program_id(0)

        # Initialize the recurrent state from (h0, c0) on the first chunk only.
        @pl.when(chunk == 0)
        def _():
            h_vmem[...] = h0_ref[...]
            c_vmem[...] = c0_ref[...]

        # ---- Vectorized pre-pass (off the serial chain): input projection +
        # combined bias for every timestep of the chunk, already laid out in the
        # padded 4x128-lane gate format.
        x_tb = x_ref[...]                               # (tc, B)
        wb = wb_ref[...]                                # (2, GATE_W): [w_ih ; bias]
        xb_ref[...] = (x_tb[:, :, None] * wb[0:1][None, :, :]
                       + wb[1:2][None, :, :])           # (tc, B, GATE_W)

        w_hh_t = w_hh_ref[...]                          # (H, GATE_W), gate-padded

        if ragged:
            n_valid = jnp.minimum(tc, T - chunk * tc)   # steps valid in this chunk

        def step(t, carry):
            h, c = carry                                # (B, H) vreg carries
            gates = (jnp.dot(h, w_hh_t, preferred_element_type=jnp.float32)
                     + xb_ref[t])                       # (B, GATE_W)
            # Gate slices start at lane offsets 0/128/256/384 -> vreg aligned,
            # no per-step lane rotations on the serial dependency chain.
            i_g = jax.nn.sigmoid(gates[:, 0 * 128:0 * 128 + H])
            f_g = jax.nn.sigmoid(gates[:, 1 * 128:1 * 128 + H])
            g_g = jnp.tanh(gates[:, 2 * 128:2 * 128 + H])
            o_g = jax.nn.sigmoid(gates[:, 3 * 128:3 * 128 + H])
            c_new = f_g * c + i_g * g_g
            h_new = o_g * jnp.tanh(c_new)
            if ragged:
                keep = t < n_valid
                h_new = jnp.where(keep, h_new, h)       # freeze state on padded steps
                c_new = jnp.where(keep, c_new, c)
            hall_ref[t] = h_new                         # off-chain store; y deferred
            return h_new, c_new

        h, c = lax.fori_loop(0, tc, step, (h_vmem[...], c_vmem[...]),
                             unroll=min(unroll, tc))

        # Persist the recurrent state across chunks; final chunk's value is what
        # lands in HBM for h_n / c_n (constant out-block index -> one writeback).
        h_vmem[...] = h
        c_vmem[...] = c
        hn_ref[...] = h
        cn_ref[...] = c

        # ---- Vectorized epilogue (off the serial chain): Linear(24 -> 1) and
        # y = x * lin for the whole chunk in one pass; one dense chunk store.
        wl = wlin_ref[...]                              # (1, H + 1) = [w_lin | b_lin]
        h_all = hall_ref[...]                           # (tc, B, H)
        lin = (jnp.sum(h_all * wl[0:1, :H][None, :, :], axis=2)
               + wl[0:1, H:H + 1])                      # (tc, B)
        y_ref[...] = x_tb * lin                         # (tc, B)

    return kernel


def lstm_l2o_forward(x, h_in, params, max_chunk=_MAX_CHUNK):
    """x: (T, B, 1) f32; h_in = (h0, c0), each (1, B, H) f32 -> (y, (h_n, c_n))."""
    T, B, _ = x.shape
    H = HIDDEN
    h0 = h_in[0][0].astype(jnp.float32)   # (B, H)
    c0 = h_in[1][0].astype(jnp.float32)   # (B, H)

    # ---- Host-side parameter prep (done once per call, outside the kernel):
    # fold the two LSTM biases, transpose w_hh, and pad each gate to its own
    # 128-lane slab so in-kernel gate extraction is vreg-aligned.
    w_ih = params["w_ih"].reshape(4 * H).astype(jnp.float32)
    w_hh_t = params["w_hh"].T.astype(jnp.float32)                      # (H, 4H)
    bias = (params["b_ih"] + params["b_hh"]).reshape(4 * H).astype(jnp.float32)

    w_hh_pad = jnp.zeros((H, GATE_W), jnp.float32)
    wb_pad = jnp.zeros((2, GATE_W), jnp.float32)    # row 0: w_ih, row 1: bias
    for g in range(4):
        w_hh_pad = w_hh_pad.at[:, g * 128:g * 128 + H].set(
            w_hh_t[:, g * H:(g + 1) * H])
        wb_pad = wb_pad.at[0, g * 128:g * 128 + H].set(w_ih[g * H:(g + 1) * H])
        wb_pad = wb_pad.at[1, g * 128:g * 128 + H].set(bias[g * H:(g + 1) * H])

    w_lin_aug = jnp.concatenate(                    # (1, H+1) = [w_lin | b_lin]
        [params["w_lin"].reshape(1, H), params["b_lin"].reshape(1, 1)],
        axis=1).astype(jnp.float32)

    # Drop the size-1 feature dim so x / y chunks are dense 2-D slabs
    # (no last-dim-1 blocks -> no 1-lane strided DMAs / per-row masked stores).
    x_tb = x[:, :, 0].astype(jnp.float32)           # (T, B)

    tc = T if T <= max_chunk else max_chunk
    n_chunks = pl.cdiv(T, tc)
    ragged = (T % tc) != 0

    kernel = _make_kernel(T, tc, ragged, _UNROLL)

    grid_spec = pltpu.PrefetchScalarGridSpec(
        num_scalar_prefetch=0,
        grid=(n_chunks,),
        in_specs=[
            pl.BlockSpec((tc, B), lambda c: (c, 0)),           # x chunk (T, B)
            pl.BlockSpec((H, GATE_W), lambda c: (0, 0)),       # w_hh^T, gate-padded
            pl.BlockSpec((2, GATE_W), lambda c: (0, 0)),       # [w_ih ; bias], padded
            pl.BlockSpec((1, H + 1), lambda c: (0, 0)),        # [w_lin | b_lin]
            pl.BlockSpec((B, H), lambda c: (0, 0)),            # h0
            pl.BlockSpec((B, H), lambda c: (0, 0)),            # c0
        ],
        out_specs=[
            pl.BlockSpec((tc, B), lambda c: (c, 0)),           # y chunk (T, B)
            pl.BlockSpec((B, H), lambda c: (0, 0)),            # h_n
            pl.BlockSpec((B, H), lambda c: (0, 0)),            # c_n
        ],
        scratch_shapes=[
            pltpu.VMEM((tc, B, GATE_W), jnp.float32),   # per-chunk input proj + bias
            pltpu.VMEM((tc, B, H), jnp.float32),        # per-chunk hidden states
            pltpu.VMEM((B, H), jnp.float32),            # h carried across chunks
            pltpu.VMEM((B, H), jnp.float32),            # c carried across chunks
        ],
    )

    y_tb, h_n, c_n = pl.pallas_call(
        kernel,
        out_shape=(
            jax.ShapeDtypeStruct((T, B), jnp.float32),
            jax.ShapeDtypeStruct((B, H), jnp.float32),
            jax.ShapeDtypeStruct((B, H), jnp.float32),
        ),
        grid_spec=grid_spec,
        compiler_params=pltpu.CompilerParams(
            dimension_semantics=("arbitrary",)),   # serial recurrence over chunks
    )(x_tb, w_hh_pad, wb_pad, w_lin_aug, h0, c0)

    y = y_tb[:, :, None]                            # back to (T, B, 1)
    return y, (h_n[None, ...], c_n[None, ...])


def _reference(x, h_in, params):
    """Pure-JAX reference matching PyTorch LSTM semantics (gate order i,f,g,o)."""
    H = HIDDEN
    w_ih, w_hh = params["w_ih"], params["w_hh"]
    b = params["b_ih"] + params["b_hh"]
    w_lin, b_lin = params["w_lin"], params["b_lin"]
    h, c = h_in[0][0], h_in[1][0]

    def step(carry, x_t):
        h, c = carry
        gates = x_t @ w_ih.T + h @ w_hh.T + b
        i = jax.nn.sigmoid(gates[:, 0 * H:1 * H])
        f = jax.nn.sigmoid(gates[:, 1 * H:2 * H])
        g = jnp.tanh(gates[:, 2 * H:3 * H])
        o = jax.nn.sigmoid(gates[:, 3 * H:4 * H])
        c = f * c + i * g
        h = o * jnp.tanh(c)
        y = x_t * (h @ w_lin.T + b_lin)
        return (h, c), y

    (h, c), ys = lax.scan(step, (h, c), x)
    return ys, (h[None, ...], c[None, ...])


if __name__ == "__main__":
    key = jax.random.PRNGKey(0)
    B, H = 4, HIDDEN

    ks = jax.random.split(key, 12)
    bound = 1.0 / np.sqrt(H)   # PyTorch default init range for LSTM / Linear
    params = {
        "w_ih":  jax.random.uniform(ks[0], (4 * H, INPUT), jnp.float32, -bound, bound),
        "w_hh":  jax.random.uniform(ks[1], (4 * H, H), jnp.float32, -bound, bound),
        "b_ih":  jax.random.uniform(ks[2], (4 * H,), jnp.float32, -bound, bound),
        "b_hh":  jax.random.uniform(ks[3], (4 * H,), jnp.float32, -bound, bound),
        "w_lin": jax.random.uniform(ks[4], (1, H), jnp.float32, -bound, bound),
        "b_lin": jax.random.uniform(ks[5], (1,), jnp.float32, -bound, bound),
    }

    def run_case(T, k0, max_chunk=_MAX_CHUNK, atol=1e-5):
        x = jax.random.normal(ks[k0], (T, B, INPUT), jnp.float32)
        h0 = jax.random.normal(ks[k0 + 1], (1, B, H), jnp.float32)
        c0 = jax.random.normal(ks[k0 + 2], (1, B, H), jnp.float32)

        y, (h_n, c_n) = lstm_l2o_forward(x, (h0, c0), params, max_chunk=max_chunk)
        jax.block_until_ready((y, h_n, c_n))

        y_ref, (h_ref, c_ref) = _reference(x, (h0, c0), params)
        np.testing.assert_allclose(np.asarray(y), np.asarray(y_ref),
                                   rtol=1e-5, atol=atol)
        np.testing.assert_allclose(np.asarray(h_n), np.asarray(h_ref),
                                   rtol=1e-5, atol=atol)
        np.testing.assert_allclose(np.asarray(c_n), np.asarray(c_ref),
                                   rtol=1e-5, atol=atol)

    # Small canonical case: T=8, B=4, single chunk.
    run_case(T=8, k0=6)
    # Ragged multi-chunk case: T=37 with 16-step chunks (exercises the cdiv grid,
    # the predicated tail, and the cross-chunk h/c carry).
    run_case(T=37, k0=9, max_chunk=16, atol=2e-5)

    print("KERNEL_OK")
</pallas_src>

<mosaic_0001>
module attributes {stable_mosaic.version = 11 : i64} {
  func.func @kernel(%arg0: i32, %arg1: memref<8x4xf32, #tpu.memory_space<vmem>>, %arg2: memref<24x512xf32, #tpu.memory_space<vmem>>, %arg3: memref<2x512xf32, #tpu.memory_space<vmem>>, %arg4: memref<1x25xf32, #tpu.memory_space<vmem>>, %arg5: memref<4x24xf32, #tpu.memory_space<vmem>>, %arg6: memref<4x24xf32, #tpu.memory_space<vmem>>, %arg7: memref<8x4xf32, #tpu.memory_space<vmem>>, %arg8: memref<4x24xf32, #tpu.memory_space<vmem>>, %arg9: memref<4x24xf32, #tpu.memory_space<vmem>>, %arg10: memref<8x4x512xf32, #tpu.memory_space<vmem>>, %arg11: memref<8x4x24xf32, #tpu.memory_space<vmem>>, %arg12: memref<4x24xf32, #tpu.memory_space<vmem>>, %arg13: memref<4x24xf32, #tpu.memory_space<vmem>>) attributes {dimension_semantics = [#tpu.dimension_semantics<arbitrary>], iteration_bounds = array<i64: 1>, scalar_prefetch = 0 : i64, scratch_operands = 4 : i64, tpu.core_type = #tpu.core_type<tc>, window_params = [{transform_indices = @transform_0, window_bounds = array<i64: 8, 4>}, {pipeline_mode = #tpu.pipeline_mode<synchronous>, transform_indices = @transform_1, window_bounds = array<i64: 24, 512>}, {pipeline_mode = #tpu.pipeline_mode<synchronous>, transform_indices = @transform_2, window_bounds = array<i64: 2, 512>}, {pipeline_mode = #tpu.pipeline_mode<synchronous>, transform_indices = @transform_3, window_bounds = array<i64: 1, 25>}, {pipeline_mode = #tpu.pipeline_mode<synchronous>, transform_indices = @transform_4, window_bounds = array<i64: 4, 24>}, {pipeline_mode = #tpu.pipeline_mode<synchronous>, transform_indices = @transform_5, window_bounds = array<i64: 4, 24>}, {transform_indices = @transform_6, window_bounds = array<i64: 8, 4>}, {pipeline_mode = #tpu.pipeline_mode<synchronous>, transform_indices = @transform_7, window_bounds = array<i64: 4, 24>}, {pipeline_mode = #tpu.pipeline_mode<synchronous>, transform_indices = @transform_8, window_bounds = array<i64: 4, 24>}]} {
    %c0_i32 = arith.constant 0 : i32
    %0 = arith.cmpi eq, %arg0, %c0_i32 : i32
    %1 = arith.extui %0 : i1 to i32
    %c0_i32_0 = arith.constant 0 : i32
    %2 = arith.cmpi ne, %1, %c0_i32_0 : i32
    scf.if %2 {
      %c0_93 = arith.constant 0 : index
      %c0_94 = arith.constant 0 : index
      %307 = vector.load %arg5[%c0_93, %c0_94] : memref<4x24xf32, #tpu.memory_space<vmem>>, vector<4x24xf32>
      %c0_95 = arith.constant 0 : index
      %c0_96 = arith.constant 0 : index
      %308 = vector.load %arg12[%c0_95, %c0_96] : memref<4x24xf32, #tpu.memory_space<vmem>>, vector<4x24xf32>
      tpu.vector_store %arg12[%c0_95, %c0_96], %307 {strides = array<i32>} : memref<4x24xf32, #tpu.memory_space<vmem>>, vector<4x24xf32>,
      %c0_97 = arith.constant 0 : index
      %c0_98 = arith.constant 0 : index
      %309 = vector.load %arg6[%c0_97, %c0_98] : memref<4x24xf32, #tpu.memory_space<vmem>>, vector<4x24xf32>
      %c0_99 = arith.constant 0 : index
      %c0_100 = arith.constant 0 : index
      %310 = vector.load %arg13[%c0_99, %c0_100] : memref<4x24xf32, #tpu.memory_space<vmem>>, vector<4x24xf32>
      tpu.vector_store %arg13[%c0_99, %c0_100], %309 {strides = array<i32>} : memref<4x24xf32, #tpu.memory_space<vmem>>, vector<4x24xf32>,
    } else {
    }
    %c0 = arith.constant 0 : index
    %c0_1 = arith.constant 0 : index
    %3 = vector.load %arg1[%c0, %c0_1] : memref<8x4xf32, #tpu.memory_space<vmem>>, vector<8x4xf32>
    %c0_2 = arith.constant 0 : index
    %c0_3 = arith.constant 0 : index
    %4 = vector.load %arg3[%c0_2, %c0_3] : memref<2x512xf32, #tpu.memory_space<vmem>>, vector<2x512xf32>
    %5 = vector.shape_cast %3 : vector<8x4xf32> to vector<8x4x1xf32>
    %6 = vector.extract_strided_slice %4 {offsets = [0, 0], sizes = [1, 512], strides = [1, 1]} : vector<2x512xf32> to vector<1x512xf32>
    %7 = vector.shape_cast %6 : vector<1x512xf32> to vector<1x1x512xf32>
    %8 = vector.broadcast %5 : vector<8x4x1xf32> to vector<8x4x512xf32>
    %9 = vector.broadcast %7 : vector<1x1x512xf32> to vector<8x4x512xf32>
    %10 = arith.mulf %8, %9 : vector<8x4x512xf32>
    %11 = vector.extract_strided_slice %4 {offsets = [1, 0], sizes = [1, 512], strides = [1, 1]} : vector<2x512xf32> to vector<1x512xf32>
    %12 = vector.shape_cast %11 : vector<1x512xf32> to vector<1x1x512xf32>
    %13 = vector.broadcast %12 : vector<1x1x512xf32> to vector<8x4x512xf32>
    %14 = arith.addf %10, %13 : vector<8x4x512xf32>
    %c0_4 = arith.constant 0 : index
    %c0_5 = arith.constant 0 : index
    %c0_6 = arith.constant 0 : index
    %15 = vector.load %arg10[%c0_4, %c0_5, %c0_6] : memref<8x4x512xf32, #tpu.memory_space<vmem>>, vector<8x4x512xf32>
    tpu.vector_store %arg10[%c0_4, %c0_5, %c0_6], %14 {strides = array<i32>} : memref<8x4x512xf32, #tpu.memory_space<vmem>>, vector<8x4x512xf32>,
    %c0_7 = arith.constant 0 : index
    %c0_8 = arith.constant 0 : index
    %16 = vector.load %arg2[%c0_7, %c0_8] : memref<24x512xf32, #tpu.memory_space<vmem>>, vector<24x512xf32>
    %c0_9 = arith.constant 0 : index
    %c0_10 = arith.constant 0 : index
    %17 = vector.load %arg12[%c0_9, %c0_10] : memref<4x24xf32, #tpu.memory_space<vmem>>, vector<4x24xf32>
    %c0_11 = arith.constant 0 : index
    %c0_12 = arith.constant 0 : index
    %18 = vector.load %arg13[%c0_11, %c0_12] : memref<4x24xf32, #tpu.memory_space<vmem>>, vector<4x24xf32>
    %c0_i32_13 = arith.constant 0 : i32
    %cst = arith.constant dense<0.000000e+00> : vector<4x512xf32>
    %19 = tpu.matmul %17, %16, %cst {dimension_numbers = #tpu.dot_dimension_numbers<[1], [0], [0], [1], [0, 0, 1, 1], [], []>} : vector<4x24xf32>, vector<24x512xf32>, vector<4x512xf32> -> vector<4x512xf32>
    %20 = arith.index_cast %c0_i32_13 : i32 to index
    %c0_14 = arith.constant 0 : index
    %c0_15 = arith.constant 0 : index
    %21 = vector.load %arg10[%20, %c0_14, %c0_15] : memref<8x4x512xf32, #tpu.memory_space<vmem>>, vector<1x4x512xf32>
    %22 = vector.shape_cast %21 : vector<1x4x512xf32> to vector<4x512xf32>
    %23 = arith.addf %19, %22 : vector<4x512xf32>
    %24 = vector.extract_strided_slice %23 {offsets = [0, 0], sizes = [4, 24], strides = [1, 1]} : vector<4x512xf32> to vector<4x24xf32>
    %25 = arith.negf %24 : vector<4x24xf32>
    %26 = math.exp %25 : vector<4x24xf32>
    %cst_16 = arith.constant 1.000000e+00 : f32
    %27 = vector.broadcast %cst_16 : f32 to vector<4x24xf32>
    %28 = arith.addf %27, %26 : vector<4x24xf32>
    %29 = arith.divf %27, %28 : vector<4x24xf32>
    %30 = vector.extract_strided_slice %23 {offsets = [0, 128], sizes = [4, 24], strides = [1, 1]} : vector<4x512xf32> to vector<4x24xf32>
    %31 = arith.negf %30 : vector<4x24xf32>
    %32 = math.exp %31 : vector<4x24xf32>
    %cst_17 = arith.constant 1.000000e+00 : f32
    %33 = vector.broadcast %cst_17 : f32 to vector<4x24xf32>
    %34 = arith.addf %33, %32 : vector<4x24xf32>
    %35 = arith.divf %33, %34 : vector<4x24xf32>
    %36 = vector.extract_strided_slice %23 {offsets = [0, 256], sizes = [4, 24], strides = [1, 1]} : vector<4x512xf32> to vector<4x24xf32>
    %37 = math.tanh %36 : vector<4x24xf32>
    %38 = vector.extract_strided_slice %23 {offsets = [0, 384], sizes = [4, 24], strides = [1, 1]} : vector<4x512xf32> to vector<4x24xf32>
    %39 = arith.negf %38 : vector<4x24xf32>
    %40 = math.exp %39 : vector<4x24xf32>
    %cst_18 = arith.constant 1.000000e+00 : f32
    %41 = vector.broadcast %cst_18 : f32 to vector<4x24xf32>
    %42 = arith.addf %41, %40 : vector<4x24xf32>
    %43 = arith.divf %41, %42 : vector<4x24xf32>
    %44 = arith.mulf %35, %18 : vector<4x24xf32>
    %45 = arith.mulf %29, %37 : vector<4x24xf32>
    %46 = arith.addf %44, %45 : vector<4x24xf32>
    %47 = math.tanh %46 : vector<4x24xf32>
    %48 = arith.mulf %43, %47 : vector<4x24xf32>
    %49 = arith.index_cast %c0_i32_13 : i32 to index
    %c0_19 = arith.constant 0 : index
    %c0_20 = arith.constant 0 : index
    %50 = vector.load %arg11[%49, %c0_19, %c0_20] : memref<8x4x24xf32, #tpu.memory_space<vmem>>, vector<1x4x24xf32>
    %51 = vector.shape_cast %50 : vector<1x4x24xf32> to vector<4x24xf32>
    %52 = vector.shape_cast %48 : vector<4x24xf32> to vector<1x4x24xf32>
    tpu.vector_store %arg11[%49, %c0_19, %c0_20], %52 {strides = array<i32>} : memref<8x4x24xf32, #tpu.memory_space<vmem>>, vector<1x4x24xf32>,
    %c1_i32 = arith.constant 1 : i32
    %cst_21 = arith.constant dense<0.000000e+00> : vector<4x512xf32>
    %53 = tpu.matmul %48, %16, %cst_21 {dimension_numbers = #tpu.dot_dimension_numbers<[1], [0], [0], [1], [0, 0, 1, 1], [], []>} : vector<4x24xf32>, vector<24x512xf32>, vector<4x512xf32> -> vector<4x512xf32>
    %54 = arith.index_cast %c1_i32 : i32 to index
    %c0_22 = arith.constant 0 : index
    %c0_23 = arith.constant 0 : index
    %55 = vector.load %arg10[%54, %c0_22, %c0_23] : memref<8x4x512xf32, #tpu.memory_space<vmem>>, vector<1x4x512xf32>
    %56 = vector.shape_cast %55 : vector<1x4x512xf32> to vector<4x512xf32>
    %57 = arith.addf %53, %56 : vector<4x512xf32>
    %58 = vector.extract_strided_slice %57 {offsets = [0, 0], sizes = [4, 24], strides = [1, 1]} : vector<4x512xf32> to vector<4x24xf32>
    %59 = arith.negf %58 : vector<4x24xf32>
    %60 = math.exp %59 : vector<4x24xf32>
    %cst_24 = arith.constant 1.000000e+00 : f32
    %61 = vector.broadcast %cst_24 : f32 to vector<4x24xf32>
    %62 = arith.addf %61, %60 : vector<4x24xf32>
    %63 = arith.divf %61, %62 : vector<4x24xf32>
    %64 = vector.extract_strided_slice %57 {offsets = [0, 128], sizes = [4, 24], strides = [1, 1]} : vector<4x512xf32> to vector<4x24xf32>
    %65 = arith.negf %64 : vector<4x24xf32>
    %66 = math.exp %65 : vector<4x24xf32>
    %cst_25 = arith.constant 1.000000e+00 : f32
    %67 = vector.broadcast %cst_25 : f32 to vector<4x24xf32>
    %68 = arith.addf %67, %66 : vector<4x24xf32>
    %69 = arith.divf %67, %68 : vector<4x24xf32>
    %70 = vector.extract_strided_slice %57 {offsets = [0, 256], sizes = [4, 24], strides = [1, 1]} : vector<4x512xf32> to vector<4x24xf32>
    %71 = math.tanh %70 : vector<4x24xf32>
    %72 = vector.extract_strided_slice %57 {offsets = [0, 384], sizes = [4, 24], strides = [1, 1]} : vector<4x512xf32> to vector<4x24xf32>
    %73 = arith.negf %72 : vector<4x24xf32>
    %74 = math.exp %73 : vector<4x24xf32>
    %cst_26 = arith.constant 1.000000e+00 : f32
    %75 = vector.broadcast %cst_26 : f32 to vector<4x24xf32>
    %76 = arith.addf %75, %74 : vector<4x24xf32>
    %77 = arith.divf %75, %76 : vector<4x24xf32>
    %78 = arith.mulf %69, %46 : vector<4x24xf32>
    %79 = arith.mulf %63, %71 : vector<4x24xf32>
    %80 = arith.addf %78, %79 : vector<4x24xf32>
    %81 = math.tanh %80 : vector<4x24xf32>
    %82 = arith.mulf %77, %81 : vector<4x24xf32>
    %83 = arith.index_cast %c1_i32 : i32 to index
    %c0_27 = arith.constant 0 : index
    %c0_28 = arith.constant 0 : index
    %84 = vector.load %arg11[%83, %c0_27, %c0_28] : memref<8x4x24xf32, #tpu.memory_space<vmem>>, vector<1x4x24xf32>
    %85 = vector.shape_cast %84 : vector<1x4x24xf32> to vector<4x24xf32>
    %86 = vector.shape_cast %82 : vector<4x24xf32> to vector<1x4x24xf32>
    tpu.vector_store %arg11[%83, %c0_27, %c0_28], %86 {strides = array<i32>} : memref<8x4x24xf32, #tpu.memory_space<vmem>>, vector<1x4x24xf32>,
    %c2_i32 = arith.constant 2 : i32
    %cst_29 = arith.constant dense<0.000000e+00> : vector<4x512xf32>
    %87 = tpu.matmul %82, %16, %cst_29 {dimension_numbers = #tpu.dot_dimension_numbers<[1], [0], [0], [1], [0, 0, 1, 1], [], []>} : vector<4x24xf32>, vector<24x512xf32>, vector<4x512xf32> -> vector<4x512xf32>
    %88 = arith.index_cast %c2_i32 : i32 to index
    %c0_30 = arith.constant 0 : index
    %c0_31 = arith.constant 0 : index
    %89 = vector.load %arg10[%88, %c0_30, %c0_31] : memref<8x4x512xf32, #tpu.memory_space<vmem>>, vector<1x4x512xf32>
    %90 = vector.shape_cast %89 : vector<1x4x512xf32> to vector<4x512xf32>
    %91 = arith.addf %87, %90 : vector<4x512xf32>
    %92 = vector.extract_strided_slice %91 {offsets = [0, 0], sizes = [4, 24], strides = [1, 1]} : vector<4x512xf32> to vector<4x24xf32>
    %93 = arith.negf %92 : vector<4x24xf32>
    %94 = math.exp %93 : vector<4x24xf32>
    %cst_32 = arith.constant 1.000000e+00 : f32
    %95 = vector.broadcast %cst_32 : f32 to vector<4x24xf32>
    %96 = arith.addf %95, %94 : vector<4x24xf32>
    %97 = arith.divf %95, %96 : vector<4x24xf32>
    %98 = vector.extract_strided_slice %91 {offsets = [0, 128], sizes = [4, 24], strides = [1, 1]} : vector<4x512xf32> to vector<4x24xf32>
    %99 = arith.negf %98 : vector<4x24xf32>
    %100 = math.exp %99 : vector<4x24xf32>
    %cst_33 = arith.constant 1.000000e+00 : f32
    %101 = vector.broadcast %cst_33 : f32 to vector<4x24xf32>
    %102 = arith.addf %101, %100 : vector<4x24xf32>
    %103 = arith.divf %101, %102 : vector<4x24xf32>
    %104 = vector.extract_strided_slice %91 {offsets = [0, 256], sizes = [4, 24], strides = [1, 1]} : vector<4x512xf32> to vector<4x24xf32>
    %105 = math.tanh %104 : vector<4x24xf32>
    %106 = vector.extract_strided_slice %91 {offsets = [0, 384], sizes = [4, 24], strides = [1, 1]} : vector<4x512xf32> to vector<4x24xf32>
    %107 = arith.negf %106 : vector<4x24xf32>
    %108 = math.exp %107 : vector<4x24xf32>
    %cst_34 = arith.constant 1.000000e+00 : f32
    %109 = vector.broadcast %cst_34 : f32 to vector<4x24xf32>
    %110 = arith.addf %109, %108 : vector<4x24xf32>
    %111 = arith.divf %109, %110 : vector<4x24xf32>
    %112 = arith.mulf %103, %80 : vector<4x24xf32>
    %113 = arith.mulf %97, %105 : vector<4x24xf32>
    %114 = arith.addf %112, %113 : vector<4x24xf32>
    %115 = math.tanh %114 : vector<4x24xf32>
    %116 = arith.mulf %111, %115 : vector<4x24xf32>
    %117 = arith.index_cast %c2_i32 : i32 to index
    %c0_35 = arith.constant 0 : index
    %c0_36 = arith.constant 0 : index
    %118 = vector.load %arg11[%117, %c0_35, %c0_36] : memref<8x4x24xf32, #tpu.memory_space<vmem>>, vector<1x4x24xf32>
    %119 = vector.shape_cast %118 : vector<1x4x24xf32> to vector<4x24xf32>
    %120 = vector.shape_cast %116 : vector<4x24xf32> to vector<1x4x24xf32>
    tpu.vector_store %arg11[%117, %c0_35, %c0_36], %120 {strides = array<i32>} : memref<8x4x24xf32, #tpu.memory_space<vmem>>, vector<1x4x24xf32>,
    %c3_i32 = arith.constant 3 : i32
    %cst_37 = arith.constant dense<0.000000e+00> : vector<4x512xf32>
    %121 = tpu.matmul %116, %16, %cst_37 {dimension_numbers = #tpu.dot_dimension_numbers<[1], [0], [0], [1], [0, 0, 1, 1], [], []>} : vector<4x24xf32>, vector<24x512xf32>, vector<4x512xf32> -> vector<4x512xf32>
    %122 = arith.index_cast %c3_i32 : i32 to index
    %c0_38 = arith.constant 0 : index
    %c0_39 = arith.constant 0 : index
    %123 = vector.load %arg10[%122, %c0_38, %c0_39] : memref<8x4x512xf32, #tpu.memory_space<vmem>>, vector<1x4x512xf32>
    %124 = vector.shape_cast %123 : vector<1x4x512xf32> to vector<4x512xf32>
    %125 = arith.addf %121, %124 : vector<4x512xf32>
    %126 = vector.extract_strided_slice %125 {offsets = [0, 0], sizes = [4, 24], strides = [1, 1]} : vector<4x512xf32> to vector<4x24xf32>
    %127 = arith.negf %126 : vector<4x24xf32>
    %128 = math.exp %127 : vector<4x24xf32>
    %cst_40 = arith.constant 1.000000e+00 : f32
    %129 = vector.broadcast %cst_40 : f32 to vector<4x24xf32>
    %130 = arith.addf %129, %128 : vector<4x24xf32>
    %131 = arith.divf %129, %130 : vector<4x24xf32>
    %132 = vector.extract_strided_slice %125 {offsets = [0, 128], sizes = [4, 24], strides = [1, 1]} : vector<4x512xf32> to vector<4x24xf32>
    %133 = arith.negf %132 : vector<4x24xf32>
    %134 = math.exp %133 : vector<4x24xf32>
    %cst_41 = arith.constant 1.000000e+00 : f32
    %135 = vector.broadcast %cst_41 : f32 to vector<4x24xf32>
    %136 = arith.addf %135, %134 : vector<4x24xf32>
    %137 = arith.divf %135, %136 : vector<4x24xf32>
    %138 = vector.extract_strided_slice %125 {offsets = [0, 256], sizes = [4, 24], strides = [1, 1]} : vector<4x512xf32> to vector<4x24xf32>
    %139 = math.tanh %138 : vector<4x24xf32>
    %140 = vector.extract_strided_slice %125 {offsets = [0, 384], sizes = [4, 24], strides = [1, 1]} : vector<4x512xf32> to vector<4x24xf32>
    %141 = arith.negf %140 : vector<4x24xf32>
    %142 = math.exp %141 : vector<4x24xf32>
    %cst_42 = arith.constant 1.000000e+00 : f32
    %143 = vector.broadcast %cst_42 : f32 to vector<4x24xf32>
    %144 = arith.addf %143, %142 : vector<4x24xf32>
    %145 = arith.divf %143, %144 : vector<4x24xf32>
    %146 = arith.mulf %137, %114 : vector<4x24xf32>
    %147 = arith.mulf %131, %139 : vector<4x24xf32>
    %148 = arith.addf %146, %147 : vector<4x24xf32>
    %149 = math.tanh %148 : vector<4x24xf32>
    %150 = arith.mulf %145, %149 : vector<4x24xf32>
    %151 = arith.index_cast %c3_i32 : i32 to index
    %c0_43 = arith.constant 0 : index
    %c0_44 = arith.constant 0 : index
    %152 = vector.load %arg11[%151, %c0_43, %c0_44] : memref<8x4x24xf32, #tpu.memory_space<vmem>>, vector<1x4x24xf32>
    %153 = vector.shape_cast %152 : vector<1x4x24xf32> to vector<4x24xf32>
    %154 = vector.shape_cast %150 : vector<4x24xf32> to vector<1x4x24xf32>
    tpu.vector_store %arg11[%151, %c0_43, %c0_44], %154 {strides = array<i32>} : memref<8x4x24xf32, #tpu.memory_space<vmem>>, vector<1x4x24xf32>,
    %c4_i32 = arith.constant 4 : i32
    %cst_45 = arith.constant dense<0.000000e+00> : vector<4x512xf32>
    %155 = tpu.matmul %150, %16, %cst_45 {dimension_numbers = #tpu.dot_dimension_numbers<[1], [0], [0], [1], [0, 0, 1, 1], [], []>} : vector<4x24xf32>, vector<24x512xf32>, vector<4x512xf32> -> vector<4x512xf32>
    %156 = arith.index_cast %c4_i32 : i32 to index
    %c0_46 = arith.constant 0 : index
    %c0_47 = arith.constant 0 : index
    %157 = vector.load %arg10[%156, %c0_46, %c0_47] : memref<8x4x512xf32, #tpu.memory_space<vmem>>, vector<1x4x512xf32>
    %158 = vector.shape_cast %157 : vector<1x4x512xf32> to vector<4x512xf32>
    %159 = arith.addf %155, %158 : vector<4x512xf32>
    %160 = vector.extract_strided_slice %159 {offsets = [0, 0], sizes = [4, 24], strides = [1, 1]} : vector<4x512xf32> to vector<4x24xf32>
    %161 = arith.negf %160 : vector<4x24xf32>
    %162 = math.exp %161 : vector<4x24xf32>
    %cst_48 = arith.constant 1.000000e+00 : f32
    %163 = vector.broadcast %cst_48 : f32 to vector<4x24xf32>
    %164 = arith.addf %163, %162 : vector<4x24xf32>
    %165 = arith.divf %163, %164 : vector<4x24xf32>
    %166 = vector.extract_strided_slice %159 {offsets = [0, 128], sizes = [4, 24], strides = [1, 1]} : vector<4x512xf32> to vector<4x24xf32>
    %167 = arith.negf %166 : vector<4x24xf32>
    %168 = math.exp %167 : vector<4x24xf32>
    %cst_49 = arith.constant 1.000000e+00 : f32
    %169 = vector.broadcast %cst_49 : f32 to vector<4x24xf32>
    %170 = arith.addf %169, %168 : vector<4x24xf32>
    %171 = arith.divf %169, %170 : vector<4x24xf32>
    %172 = vector.extract_strided_slice %159 {offsets = [0, 256], sizes = [4, 24], strides = [1, 1]} : vector<4x512xf32> to vector<4x24xf32>
    %173 = math.tanh %172 : vector<4x24xf32>
    %174 = vector.extract_strided_slice %159 {offsets = [0, 384], sizes = [4, 24], strides = [1, 1]} : vector<4x512xf32> to vector<4x24xf32>
    %175 = arith.negf %174 : vector<4x24xf32>
    %176 = math.exp %175 : vector<4x24xf32>
    %cst_50 = arith.constant 1.000000e+00 : f32
    %177 = vector.broadcast %cst_50 : f32 to vector<4x24xf32>
    %178 = arith.addf %177, %176 : vector<4x24xf32>
    %179 = arith.divf %177, %178 : vector<4x24xf32>
    %180 = arith.mulf %171, %148 : vector<4x24xf32>
    %181 = arith.mulf %165, %173 : vector<4x24xf32>
    %182 = arith.addf %180, %181 : vector<4x24xf32>
    %183 = math.tanh %182 : vector<4x24xf32>
    %184 = arith.mulf %179, %183 : vector<4x24xf32>
    %185 = arith.index_cast %c4_i32 : i32 to index
    %c0_51 = arith.constant 0 : index
    %c0_52 = arith.constant 0 : index
    %186 = vector.load %arg11[%185, %c0_51, %c0_52] : memref<8x4x24xf32, #tpu.memory_space<vmem>>, vector<1x4x24xf32>
    %187 = vector.shape_cast %186 : vector<1x4x24xf32> to vector<4x24xf32>
    %188 = vector.shape_cast %184 : vector<4x24xf32> to vector<1x4x24xf32>
    tpu.vector_store %arg11[%185, %c0_51, %c0_52], %188 {strides = array<i32>} : memref<8x4x24xf32, #tpu.memory_space<vmem>>, vector<1x4x24xf32>,
    %c5_i32 = arith.constant 5 : i32
    %cst_53 = arith.constant dense<0.000000e+00> : vector<4x512xf32>
    %189 = tpu.matmul %184, %16, %cst_53 {dimension_numbers = #tpu.dot_dimension_numbers<[1], [0], [0], [1], [0, 0, 1, 1], [], []>} : vector<4x24xf32>, vector<24x512xf32>, vector<4x512xf32> -> vector<4x512xf32>
    %190 = arith.index_cast %c5_i32 : i32 to index
    %c0_54 = arith.constant 0 : index
    %c0_55 = arith.constant 0 : index
    %191 = vector.load %arg10[%190, %c0_54, %c0_55] : memref<8x4x512xf32, #tpu.memory_space<vmem>>, vector<1x4x512xf32>
    %192 = vector.shape_cast %191 : vector<1x4x512xf32> to vector<4x512xf32>
    %193 = arith.addf %189, %192 : vector<4x512xf32>
    %194 = vector.extract_strided_slice %193 {offsets = [0, 0], sizes = [4, 24], strides = [1, 1]} : vector<4x512xf32> to vector<4x24xf32>
    %195 = arith.negf %194 : vector<4x24xf32>
    %196 = math.exp %195 : vector<4x24xf32>
    %cst_56 = arith.constant 1.000000e+00 : f32
    %197 = vector.broadcast %cst_56 : f32 to vector<4x24xf32>
    %198 = arith.addf %197, %196 : vector<4x24xf32>
    %199 = arith.divf %197, %198 : vector<4x24xf32>
    %200 = vector.extract_strided_slice %193 {offsets = [0, 128], sizes = [4, 24], strides = [1, 1]} : vector<4x512xf32> to vector<4x24xf32>
    %201 = arith.negf %200 : vector<4x24xf32>
    %202 = math.exp %201 : vector<4x24xf32>
    %cst_57 = arith.constant 1.000000e+00 : f32
    %203 = vector.broadcast %cst_57 : f32 to vector<4x24xf32>
    %204 = arith.addf %203, %202 : vector<4x24xf32>
    %205 = arith.divf %203, %204 : vector<4x24xf32>
    %206 = vector.extract_strided_slice %193 {offsets = [0, 256], sizes = [4, 24], strides = [1, 1]} : vector<4x512xf32> to vector<4x24xf32>
    %207 = math.tanh %206 : vector<4x24xf32>
    %208 = vector.extract_strided_slice %193 {offsets = [0, 384], sizes = [4, 24], strides = [1, 1]} : vector<4x512xf32> to vector<4x24xf32>
    %209 = arith.negf %208 : vector<4x24xf32>
    %210 = math.exp %209 : vector<4x24xf32>
    %cst_58 = arith.constant 1.000000e+00 : f32
    %211 = vector.broadcast %cst_58 : f32 to vector<4x24xf32>
    %212 = arith.addf %211, %210 : vector<4x24xf32>
    %213 = arith.divf %211, %212 : vector<4x24xf32>
    %214 = arith.mulf %205, %182 : vector<4x24xf32>
    %215 = arith.mulf %199, %207 : vector<4x24xf32>
    %216 = arith.addf %214, %215 : vector<4x24xf32>
    %217 = math.tanh %216 : vector<4x24xf32>
    %218 = arith.mulf %213, %217 : vector<4x24xf32>
    %219 = arith.index_cast %c5_i32 : i32 to index
    %c0_59 = arith.constant 0 : index
    %c0_60 = arith.constant 0 : index
    %220 = vector.load %arg11[%219, %c0_59, %c0_60] : memref<8x4x24xf32, #tpu.memory_space<vmem>>, vector<1x4x24xf32>
    %221 = vector.shape_cast %220 : vector<1x4x24xf32> to vector<4x24xf32>
    %222 = vector.shape_cast %218 : vector<4x24xf32> to vector<1x4x24xf32>
    tpu.vector_store %arg11[%219, %c0_59, %c0_60], %222 {strides = array<i32>} : memref<8x4x24xf32, #tpu.memory_space<vmem>>, vector<1x4x24xf32>,
    %c6_i32 = arith.constant 6 : i32
    %cst_61 = arith.constant dense<0.000000e+00> : vector<4x512xf32>
    %223 = tpu.matmul %218, %16, %cst_61 {dimension_numbers = #tpu.dot_dimension_numbers<[1], [0], [0], [1], [0, 0, 1, 1], [], []>} : vector<4x24xf32>, vector<24x512xf32>, vector<4x512xf32> -> vector<4x512xf32>
    %224 = arith.index_cast %c6_i32 : i32 to index
    %c0_62 = arith.constant 0 : index
    %c0_63 = arith.constant 0 : index
    %225 = vector.load %arg10[%224, %c0_62, %c0_63] : memref<8x4x512xf32, #tpu.memory_space<vmem>>, vector<1x4x512xf32>
    %226 = vector.shape_cast %225 : vector<1x4x512xf32> to vector<4x512xf32>
    %227 = arith.addf %223, %226 : vector<4x512xf32>
    %228 = vector.extract_strided_slice %227 {offsets = [0, 0], sizes = [4, 24], strides = [1, 1]} : vector<4x512xf32> to vector<4x24xf32>
    %229 = arith.negf %228 : vector<4x24xf32>
    %230 = math.exp %229 : vector<4x24xf32>
    %cst_64 = arith.constant 1.000000e+00 : f32
    %231 = vector.broadcast %cst_64 : f32 to vector<4x24xf32>
    %232 = arith.addf %231, %230 : vector<4x24xf32>
    %233 = arith.divf %231, %232 : vector<4x24xf32>
    %234 = vector.extract_strided_slice %227 {offsets = [0, 128], sizes = [4, 24], strides = [1, 1]} : vector<4x512xf32> to vector<4x24xf32>
    %235 = arith.negf %234 : vector<4x24xf32>
    %236 = math.exp %235 : vector<4x24xf32>
    %cst_65 = arith.constant 1.000000e+00 : f32
    %237 = vector.broadcast %cst_65 : f32 to vector<4x24xf32>
    %238 = arith.addf %237, %236 : vector<4x24xf32>
    %239 = arith.divf %237, %238 : vector<4x24xf32>
    %240 = vector.extract_strided_slice %227 {offsets = [0, 256], sizes = [4, 24], strides = [1, 1]} : vector<4x512xf32> to vector<4x24xf32>
    %241 = math.tanh %240 : vector<4x24xf32>
    %242 = vector.extract_strided_slice %227 {offsets = [0, 384], sizes = [4, 24], strides = [1, 1]} : vector<4x512xf32> to vector<4x24xf32>
    %243 = arith.negf %242 : vector<4x24xf32>
    %244 = math.exp %243 : vector<4x24xf32>
    %cst_66 = arith.constant 1.000000e+00 : f32
    %245 = vector.broadcast %cst_66 : f32 to vector<4x24xf32>
    %246 = arith.addf %245, %244 : vector<4x24xf32>
    %247 = arith.divf %245, %246 : vector<4x24xf32>
    %248 = arith.mulf %239, %216 : vector<4x24xf32>
    %249 = arith.mulf %233, %241 : vector<4x24xf32>
    %250 = arith.addf %248, %249 : vector<4x24xf32>
    %251 = math.tanh %250 : vector<4x24xf32>
    %252 = arith.mulf %247, %251 : vector<4x24xf32>
    %253 = arith.index_cast %c6_i32 : i32 to index
    %c0_67 = arith.constant 0 : index
    %c0_68 = arith.constant 0 : index
    %254 = vector.load %arg11[%253, %c0_67, %c0_68] : memref<8x4x24xf32, #tpu.memory_space<vmem>>, vector<1x4x24xf32>
    %255 = vector.shape_cast %254 : vector<1x4x24xf32> to vector<4x24xf32>
    %256 = vector.shape_cast %252 : vector<4x24xf32> to vector<1x4x24xf32>
    tpu.vector_store %arg11[%253, %c0_67, %c0_68], %256 {strides = array<i32>} : memref<8x4x24xf32, #tpu.memory_space<vmem>>, vector<1x4x24xf32>,
    %c7_i32 = arith.constant 7 : i32
    %cst_69 = arith.constant dense<0.000000e+00> : vector<4x512xf32>
    %257 = tpu.matmul %252, %16, %cst_69 {dimension_numbers = #tpu.dot_dimension_numbers<[1], [0], [0], [1], [0, 0, 1, 1], [], []>} : vector<4x24xf32>, vector<24x512xf32>, vector<4x512xf32> -> vector<4x512xf32>
    %258 = arith.index_cast %c7_i32 : i32 to index
    %c0_70 = arith.constant 0 : index
    %c0_71 = arith.constant 0 : index
    %259 = vector.load %arg10[%258, %c0_70, %c0_71] : memref<8x4x512xf32, #tpu.memory_space<vmem>>, vector<1x4x512xf32>
    %260 = vector.shape_cast %259 : vector<1x4x512xf32> to vector<4x512xf32>
    %261 = arith.addf %257, %260 : vector<4x512xf32>
    %262 = vector.extract_strided_slice %261 {offsets = [0, 0], sizes = [4, 24], strides = [1, 1]} : vector<4x512xf32> to vector<4x24xf32>
    %263 = arith.negf %262 : vector<4x24xf32>
    %264 = math.exp %263 : vector<4x24xf32>
    %cst_72 = arith.constant 1.000000e+00 : f32
    %265 = vector.broadcast %cst_72 : f32 to vector<4x24xf32>
    %266 = arith.addf %265, %264 : vector<4x24xf32>
    %267 = arith.divf %265, %266 : vector<4x24xf32>
    %268 = vector.extract_strided_slice %261 {offsets = [0, 128], sizes = [4, 24], strides = [1, 1]} : vector<4x512xf32> to vector<4x24xf32>
    %269 = arith.negf %268 : vector<4x24xf32>
    %270 = math.exp %269 : vector<4x24xf32>
    %cst_73 = arith.constant 1.000000e+00 : f32
    %271 = vector.broadcast %cst_73 : f32 to vector<4x24xf32>
    %272 = arith.addf %271, %270 : vector<4x24xf32>
    %273 = arith.divf %271, %272 : vector<4x24xf32>
    %274 = vector.extract_strided_slice %261 {offsets = [0, 256], sizes = [4, 24], strides = [1, 1]} : vector<4x512xf32> to vector<4x24xf32>
    %275 = math.tanh %274 : vector<4x24xf32>
    %276 = vector.extract_strided_slice %261 {offsets = [0, 384], sizes = [4, 24], strides = [1, 1]} : vector<4x512xf32> to vector<4x24xf32>
    %277 = arith.negf %276 : vector<4x24xf32>
    %278 = math.exp %277 : vector<4x24xf32>
    %cst_74 = arith.constant 1.000000e+00 : f32
    %279 = vector.broadcast %cst_74 : f32 to vector<4x24xf32>
    %280 = arith.addf %279, %278 : vector<4x24xf32>
    %281 = arith.divf %279, %280 : vector<4x24xf32>
    %282 = arith.mulf %273, %250 : vector<4x24xf32>
    %283 = arith.mulf %267, %275 : vector<4x24xf32>
    %284 = arith.addf %282, %283 : vector<4x24xf32>
    %285 = math.tanh %284 : vector<4x24xf32>
    %286 = arith.mulf %281, %285 : vector<4x24xf32>
    %287 = arith.index_cast %c7_i32 : i32 to index
    %c0_75 = arith.constant 0 : index
    %c0_76 = arith.constant 0 : index
    %288 = vector.load %arg11[%287, %c0_75, %c0_76] : memref<8x4x24xf32, #tpu.memory_space<vmem>>, vector<1x4x24xf32>
    %289 = vector.shape_cast %288 : vector<1x4x24xf32> to vector<4x24xf32>
    %290 = vector.shape_cast %286 : vector<4x24xf32> to vector<1x4x24xf32>
    tpu.vector_store %arg11[%287, %c0_75, %c0_76], %290 {strides = array<i32>} : memref<8x4x24xf32, #tpu.memory_space<vmem>>, vector<1x4x24xf32>,
    %c8_i32 = arith.constant 8 : i32
    %c0_77 = arith.constant 0 : index
    %c0_78 = arith.constant 0 : index
    %291 = vector.load %arg12[%c0_77, %c0_78] : memref<4x24xf32, #tpu.memory_space<vmem>>, vector<4x24xf32>
    tpu.vector_store %arg12[%c0_77, %c0_78], %286 {strides = array<i32>} : memref<4x24xf32, #tpu.memory_space<vmem>>, vector<4x24xf32>,
    %c0_79 = arith.constant 0 : index
    %c0_80 = arith.constant 0 : index
    %292 = vector.load %arg13[%c0_79, %c0_80] : memref<4x24xf32, #tpu.memory_space<vmem>>, vector<4x24xf32>
    tpu.vector_store %arg13[%c0_79, %c0_80], %284 {strides = array<i32>} : memref<4x24xf32, #tpu.memory_space<vmem>>, vector<4x24xf32>,
    %c0_81 = arith.constant 0 : index
    %c0_82 = arith.constant 0 : index
    %293 = vector.load %arg8[%c0_81, %c0_82] : memref<4x24xf32, #tpu.memory_space<vmem>>, vector<4x24xf32>
    tpu.vector_store %arg8[%c0_81, %c0_82], %286 {strides = array<i32>} : memref<4x24xf32, #tpu.memory_space<vmem>>, vector<4x24xf32>,
    %c0_83 = arith.constant 0 : index
    %c0_84 = arith.constant 0 : index
    %294 = vector.load %arg9[%c0_83, %c0_84] : memref<4x24xf32, #tpu.memory_space<vmem>>, vector<4x24xf32>
    tpu.vector_store %arg9[%c0_83, %c0_84], %284 {strides = array<i32>} : memref<4x24xf32, #tpu.memory_space<vmem>>, vector<4x24xf32>,
    %c0_85 = arith.constant 0 : index
    %c0_86 = arith.constant 0 : index
    %295 = vector.load %arg4[%c0_85, %c0_86] : memref<1x25xf32, #tpu.memory_space<vmem>>, vector<1x25xf32>
    %c0_87 = arith.constant 0 : index
    %c0_88 = arith.constant 0 : index
    %c0_89 = arith.constant 0 : index
    %296 = vector.load %arg11[%c0_87, %c0_88, %c0_89] : memref<8x4x24xf32, #tpu.memory_space<vmem>>, vector<8x4x24xf32>
    %297 = vector.extract_strided_slice %295 {offsets = [0, 0], sizes = [1, 24], strides = [1, 1]} : vector<1x25xf32> to vector<1x24xf32>
    %298 = vector.shape_cast %297 : vector<1x24xf32> to vector<1x1x24xf32>
    %299 = vector.broadcast %298 : vector<1x1x24xf32> to vector<8x4x24xf32>
    %300 = arith.mulf %296, %299 : vector<8x4x24xf32>
    %cst_90 = arith.constant dense<0.000000e+00> : vector<8x4xf32>
    %301 = vector.multi_reduction <add>, %300, %cst_90 [2] : vector<8x4x24xf32> to vector<8x4xf32>
    %302 = vector.extract_strided_slice %295 {offsets = [0, 24], sizes = [1, 1], strides = [1, 1]} : vector<1x25xf32> to vector<1x1xf32>
    %303 = vector.broadcast %302 : vector<1x1xf32> to vector<8x4xf32>
    %304 = arith.addf %301, %303 : vector<8x4xf32>
    %305 = arith.mulf %3, %304 : vector<8x4xf32>
    %c0_91 = arith.constant 0 : index
    %c0_92 = arith.constant 0 : index
    %306 = vector.load %arg7[%c0_91, %c0_92] : memref<8x4xf32, #tpu.memory_space<vmem>>, vector<8x4xf32>
    tpu.vector_store %arg7[%c0_91, %c0_92], %305 {strides = array<i32>} : memref<8x4xf32, #tpu.memory_space<vmem>>, vector<8x4xf32>,
    return
  }
  func.func @transform_0(%arg0: i32) -> (i32, i32) {
    %c0_i32 = arith.constant 0 : i32
    %c0_i32_0 = arith.constant 0 : i32
    return %arg0, %c0_i32 : i32, i32
  }
  func.func @transform_1(%arg0: i32) -> (i32, i32) {
    %c0_i32 = arith.constant 0 : i32
    %c0_i32_0 = arith.constant 0 : i32
    %c0_i32_1 = arith.constant 0 : i32
    return %c0_i32, %c0_i32_0 : i32, i32
  }
  func.func @transform_2(%arg0: i32) -> (i32, i32) {
    %c0_i32 = arith.constant 0 : i32
    %c0_i32_0 = arith.constant 0 : i32
    %c0_i32_1 = arith.constant 0 : i32
    return %c0_i32, %c0_i32_0 : i32, i32
  }
  func.func @transform_3(%arg0: i32) -> (i32, i32) {
    %c0_i32 = arith.constant 0 : i32
    %c0_i32_0 = arith.constant 0 : i32
    %c0_i32_1 = arith.constant 0 : i32
    return %c0_i32, %c0_i32_0 : i32, i32
  }
  func.func @transform_4(%arg0: i32) -> (i32, i32) {
    %c0_i32 = arith.constant 0 : i32
    %c0_i32_0 = arith.constant 0 : i32
    %c0_i32_1 = arith.constant 0 : i32
    return %c0_i32, %c0_i32_0 : i32, i32
  }
  func.func @transform_5(%arg0: i32) -> (i32, i32) {
    %c0_i32 = arith.constant 0 : i32
    %c0_i32_0 = arith.constant 0 : i32
    %c0_i32_1 = arith.constant 0 : i32
    return %c0_i32, %c0_i32_0 : i32, i32
  }
  func.func @transform_6(%arg0: i32) -> (i32, i32) {
    %c0_i32 = arith.constant 0 : i32
    %c0_i32_0 = arith.constant 0 : i32
    return %arg0, %c0_i32 : i32, i32
  }
  func.func @transform_7(%arg0: i32) -> (i32, i32) {
    %c0_i32 = arith.constant 0 : i32
    %c0_i32_0 = arith.constant 0 : i32
    %c0_i32_1 = arith.constant 0 : i32
    return %c0_i32, %c0_i32_0 : i32, i32
  }
  func.func @transform_8(%arg0: i32) -> (i32, i32) {
    %c0_i32 = arith.constant 0 : i32
    %c0_i32_0 = arith.constant 0 : i32
    %c0_i32_1 = arith.constant 0 : i32
    return %c0_i32, %c0_i32_0 : i32, i32
  }
}

</mosaic_0001>

<llo_original>
// kernel: tpu_custom_call.1
$region0: #{tpu_custom_call.1}
  #allocation0 [shape = 'u32[]', space=smem, size = 0x4, offset = 0x4, fixed_abs, tag = 'smem constant byte address 0x4 - core index']
  #allocation1 [shape = 'u32[144,128]{1,0:T(1,128)}', space=vmem, size = 0x12000, scoped, tag = 'internal scratch']
  #allocation2 [shape = 'f32[8,4,512]{2,1,0:T(4,128)}', space=vmem, size = 0x10000, scoped, tag = 'scratch operand']
  #allocation3 [shape = 'f32[8,4,24]{2,1,0:T(4,128)}', space=vmem, size = 0x4000, scoped, tag = 'scratch operand']
  #allocation4 [shape = 'f32[4,24]{1,0:T(4,128)}', space=vmem, size = 0x800, scoped, tag = 'scratch operand']
  #allocation5 [shape = 'f32[4,24]{1,0:T(4,128)}', space=vmem, size = 0x800, scoped, tag = 'scratch operand']
  %s0 = inlined_call_operand.vmem [shape: f32[8,4], index: 0, kind: input, shape index: {}]
  %s1 = inlined_call_operand.hbm [shape: f32[24,512], index: 1, kind: input, shape index: {}]
  %s2 = inlined_call_operand.vmem [shape: f32[2,512], index: 2, kind: input, shape index: {}]
  %s3 = inlined_call_operand.vmem [shape: f32[1,25], index: 3, kind: input, shape index: {}]
  %s4 = inlined_call_operand.vmem [shape: f32[4,24], index: 4, kind: input, shape index: {}]
  %s5 = inlined_call_operand.vmem [shape: f32[4,24], index: 5, kind: input, shape index: {}]
  %s6 = inlined_call_operand.vmem [shape: f32[8,4], index: 6, kind: output, shape index: {0}]
  %s7 = inlined_call_operand.hbm [shape: f32[4,24], index: 7, kind: output, shape index: {1}]
  %s8 = inlined_call_operand.hbm [shape: f32[4,24], index: 8, kind: output, shape index: {2}]
  %9 = xla_tuple %s6, %s7, %s8
  %s10 = sld [smem:[#allocation0]]
  $region58: #{tpu_custom_call.1} parent=0
    _
  %s12 = ssub.s32 1, %s10
  %s13 = scalar_select 0, %s12, %s10
  $region1: #{tpu_custom_call.1} parent=0
    #allocation6 [shape = 'u8[49152]{0}', space=vmem, size = 0xc000, scoped, tag = 'input window, operand 1, single buffered']
    #allocation7 [shape = 's32[1]{0}', space=sflag, size = 0x4, scoped, tag = 'scoped memory for tpu_custom_call.1']
    #allocation8 [shape = 's32[1]{0}', space=sflag, size = 0x4, scoped, tag = 'scoped memory for tpu_custom_call.1']
    #allocation9 [shape = 'u8[2048]{0}', space=vmem, size = 0x800, scoped, tag = 'output window, operand 1, single buffered']
    #allocation10 [shape = 'u8[2048]{0}', space=vmem, size = 0x800, scoped, tag = 'output window, operand 2, single buffered']
    #allocation11 [shape = 's32[1]{0}', space=sflag, size = 0x4, scoped, tag = 'scoped memory for tpu_custom_call.1']
    %14 = vsyncpa [#allocation7], 0
    %15 = vsyncpa [#allocation8], 0
    %16 = vsyncpa [#allocation11], 0
    // Predicated region
    $region2: #{tpu_custom_call.1} parent=1 // pred_check
      _
    $region3: #{tpu_custom_call.1} parent=1 // pred_check_branch
      %18 = sbr.rel (0) target = $region5
    $region4: #{tpu_custom_call.1} parent=1 // pred_region
      _
    $region5: #{tpu_custom_call.1} parent=1 // pred_fallthru
      _
    // Predicated region
    $region6: #{tpu_custom_call.1} parent=1 // pred_check
      _
    $region7: #{tpu_custom_call.1} parent=1 // pred_check_branch
      %20 = sbr.rel (0) target = $region9
    $region8: #{tpu_custom_call.1} parent=1 // pred_region
      %s22 = ssub.s32 1536, 1536
      %23 = vsyncadd [#allocation7], %s22
      %s24 = sshll.u32 [#allocation6], 4
      %s25 = int_to_ptr.vmem [resolvable:$true] %s24
      %30 = dma.hbm_to_vmem [thread:$0]  %s1, 1536, %s25, [#allocation7], 512, 512, 32
    $region9: #{tpu_custom_call.1} parent=1 // pred_fallthru
      _
    // Predicated region
    $region10: #{tpu_custom_call.1} parent=1 // pred_check
      _
    $region11: #{tpu_custom_call.1} parent=1 // pred_check_branch
      %32 = sbr.rel (0) target = $region13
    $region12: #{tpu_custom_call.1} parent=1 // pred_region
      _
    $region13: #{tpu_custom_call.1} parent=1 // pred_fallthru
      _
    // Predicated region
    $region14: #{tpu_custom_call.1} parent=1 // pred_check
      _
    $region15: #{tpu_custom_call.1} parent=1 // pred_check_branch
      %34 = sbr.rel (0) target = $region17
    $region16: #{tpu_custom_call.1} parent=1 // pred_region
      _
    $region17: #{tpu_custom_call.1} parent=1 // pred_fallthru
      _
    // Predicated region
    $region18: #{tpu_custom_call.1} parent=1 // pred_check
      _
    $region19: #{tpu_custom_call.1} parent=1 // pred_check_branch
      %36 = sbr.rel (0) target = $region21
    $region20: #{tpu_custom_call.1} parent=1 // pred_region
      _
    $region21: #{tpu_custom_call.1} parent=1 // pred_fallthru
      _
    // Predicated region
    $region22: #{tpu_custom_call.1} parent=1 // pred_check
      _
    $region23: #{tpu_custom_call.1} parent=1 // pred_check_branch
      %38 = sbr.rel (0) target = $region25
    $region24: #{tpu_custom_call.1} parent=1 // pred_region
      _
    $region25: #{tpu_custom_call.1} parent=1 // pred_fallthru
      _
    // Predicated region
    $region26: #{tpu_custom_call.1} parent=1 // pred_check
      _
    $region27: #{tpu_custom_call.1} parent=1 // pred_check_branch
      %40 = sbr.rel (0) target = $region29
    $region28: #{tpu_custom_call.1} parent=1 // pred_region
      %41 = dma.done [#allocation7], 1536
    $region29: #{tpu_custom_call.1} parent=1 // pred_fallthru
      _
    %p42 = scmp.eq.s32.totalorder 0, 0
    // Predicated region
    $region30: #{tpu_custom_call.1} parent=1 // pred_check
      %p43 = pneg %p42
    $region31: #{tpu_custom_call.1} parent=1 // pred_check_branch
      %45 = sbr.rel (%p43) target = $region33
    $region32: #{tpu_custom_call.1} parent=1 // pred_region
      %v46 = vld [vmem:[%s4] sm:$0xf]
      %vm47 = vcmask 191488
      %48 = vst.msk [vmem:[#allocation4] sm:$0xf] %vm47, %v46
      %v49 = vld [vmem:[%s5] sm:$0xf]
      %50 = vst.msk [vmem:[#allocation5] sm:$0xf] %vm47, %v49
    $region33: #{tpu_custom_call.1} parent=1 // pred_fallthru
      _
    %v51 = vld [vmem:[%s0] sm:$0xff]
    %v52 = vld [vmem:[%s2] sm:$0xff]
    %v53 = vlaneseq
    %v54 = vshrl.u32 %v53, 7
    %v55 = vsub.s32 0, %v54
    %v56 = vrot.slane %v51, %v55
    %58 = vbcast.lane.b32.xlu0 %v56, 256
    %v59 = vpop.permute.xlu0 %58
    %v60 = vlaneseq
    %v61 = vshrl.u32 %v60, 7
    %v62 = vsub.s32 1, %v61
    %v63 = vrot.slane %v51, %v62
    %65 = vbcast.lane.b32.xlu0 %v63, 256
    %v66 = vpop.permute.xlu0 %65
    %v67 = vlaneseq
    %v68 = vshrl.u32 %v67, 7
    %v69 = vsub.s32 2, %v68
    %v70 = vrot.slane %v51, %v69
    %72 = vbcast.lane.b32.xlu0 %v70, 256
    %v73 = vpop.permute.xlu0 %72
    %v74 = vlaneseq
    %v75 = vshrl.u32 %v74, 7
    %v76 = vsub.s32 3, %v75
    %v77 = vrot.slane %v51, %v76
    %79 = vbcast.lane.b32.xlu0 %v77, 256
    %v80 = vpop.permute.xlu0 %79
    %v81 = vlaneseq
    %v82 = vshrl.u32 %v81, 7
    %v83 = vsub.s32 4, %v82
    %v84 = vrot.slane %v51, %v83
    %86 = vbcast.lane.b32.xlu0 %v84, 256
    %v87 = vpop.permute.xlu0 %86
    %v88 = vlaneseq
    %v89 = vshrl.u32 %v88, 7
    %v90 = vsub.s32 5, %v89
    %v91 = vrot.slane %v51, %v90
    %93 = vbcast.lane.b32.xlu0 %v91, 256
    %v94 = vpop.permute.xlu0 %93
    %v95 = vlaneseq
    %v96 = vshrl.u32 %v95, 7
    %v97 = vsub.s32 6, %v96
    %v98 = vrot.slane %v51, %v97
    %100 = vbcast.lane.b32.xlu0 %v98, 256
    %v101 = vpop.permute.xlu0 %100
    %v102 = vlaneseq
    %v103 = vshrl.u32 %v102, 7
    %v104 = vsub.s32 7, %v103
    %v105 = vrot.slane %v51, %v104
    %107 = vbcast.lane.b32.xlu0 %v105, 256
    %v108 = vpop.permute.xlu0 %107
    %v110 = vlaneseq
    %v111 = vshrl.u32 %v110, 7
    %v112 = vsub.s32 0, %v111
    %v113 = vrot.slane %v52, %v112
    %v114 = vlaneseq
    %v115 = vshrl.u32 %v114, 7
    %v116 = vsub.s32 2, %v115
    %v117 = vrot.slane %v52, %v116
    %v118 = vlaneseq
    %v119 = vshrl.u32 %v118, 7
    %v120 = vsub.s32 4, %v119
    %v121 = vrot.slane %v52, %v120
    %v122 = vlaneseq
    %v123 = vshrl.u32 %v122, 7
    %v124 = vsub.s32 6, %v123
    %v125 = vrot.slane %v52, %v124
    %v130 = vlaneseq
    %v131 = vshrl.u32 %v130, 7
    %v132 = vsub.s32 0, %v131
    %v133 = vrot.slane %v113, %v132
    %v134 = vlaneseq
    %v135 = vshrl.u32 %v134, 7
    %v136 = vsub.s32 0, %v135
    %v137 = vrot.slane %v117, %v136
    %v138 = vlaneseq
    %v139 = vshrl.u32 %v138, 7
    %v140 = vsub.s32 0, %v139
    %v141 = vrot.slane %v121, %v140
    %v142 = vlaneseq
    %v143 = vshrl.u32 %v142, 7
    %v144 = vsub.s32 0, %v143
    %v145 = vrot.slane %v125, %v144
    %v146 = vmul.f32 %v59, %v133
    %v147 = vmul.f32 %v59, %v137
    %v148 = vmul.f32 %v59, %v141
    %v149 = vmul.f32 %v59, %v145
    %v150 = vmul.f32 %v66, %v133
    %v151 = vmul.f32 %v66, %v137
    %v152 = vmul.f32 %v66, %v141
    %v153 = vmul.f32 %v66, %v145
    %v154 = vmul.f32 %v73, %v133
    %v155 = vmul.f32 %v73, %v137
    %v156 = vmul.f32 %v73, %v141
    %v157 = vmul.f32 %v73, %v145
    %v158 = vmul.f32 %v80, %v133
    %v159 = vmul.f32 %v80, %v137
    %v160 = vmul.f32 %v80, %v141
    %v161 = vmul.f32 %v80, %v145
    %v162 = vmul.f32 %v87, %v133
    %v163 = vmul.f32 %v87, %v137
    %v164 = vmul.f32 %v87, %v141
    %v165 = vmul.f32 %v87, %v145
    %v166 = vmul.f32 %v94, %v133
    %v167 = vmul.f32 %v94, %v137
    %v168 = vmul.f32 %v94, %v141
    %v169 = vmul.f32 %v94, %v145
    %v170 = vmul.f32 %v101, %v133
    %v171 = vmul.f32 %v101, %v137
    %v172 = vmul.f32 %v101, %v141
    %v173 = vmul.f32 %v101, %v145
    %v174 = vmul.f32 %v108, %v133
    %v175 = vmul.f32 %v108, %v137
    %v176 = vmul.f32 %v108, %v141
    %v177 = vmul.f32 %v108, %v145
    %v178 = vlaneseq
    %v179 = vshrl.u32 %v178, 7
    %v180 = vsub.s32 1, %v179
    %v181 = vrot.slane %v52, %v180
    %v182 = vlaneseq
    %v183 = vshrl.u32 %v182, 7
    %v184 = vsub.s32 3, %v183
    %v185 = vrot.slane %v52, %v184
    %v186 = vlaneseq
    %v187 = vshrl.u32 %v186, 7
    %v188 = vsub.s32 5, %v187
    %v189 = vrot.slane %v52, %v188
    %v190 = vlaneseq
    %v191 = vshrl.u32 %v190, 7
    %v192 = vsub.s32 7, %v191
    %v193 = vrot.slane %v52, %v192
    %v198 = vlaneseq
    %v199 = vshrl.u32 %v198, 7
    %v200 = vsub.s32 1, %v199
    %v201 = vrot.slane %v181, %v200
    %v202 = vlaneseq
    %v203 = vshrl.u32 %v202, 7
    %v204 = vsub.s32 1, %v203
    %v205 = vrot.slane %v185, %v204
    %v206 = vlaneseq
    %v207 = vshrl.u32 %v206, 7
    %v208 = vsub.s32 1, %v207
    %v209 = vrot.slane %v189, %v208
    %v210 = vlaneseq
    %v211 = vshrl.u32 %v210, 7
    %v212 = vsub.s32 1, %v211
    %v213 = vrot.slane %v193, %v212
    %v214 = vadd.f32 %v146, %v201
    %v215 = vadd.f32 %v147, %v205
    %v216 = vadd.f32 %v148, %v209
    %v217 = vadd.f32 %v149, %v213
    %v218 = vadd.f32 %v150, %v201
    %v219 = vadd.f32 %v151, %v205
    %v220 = vadd.f32 %v152, %v209
    %v221 = vadd.f32 %v153, %v213
    %v222 = vadd.f32 %v154, %v201
    %v223 = vadd.f32 %v155, %v205
    %v224 = vadd.f32 %v156, %v209
    %v225 = vadd.f32 %v157, %v213
    %v226 = vadd.f32 %v158, %v201
    %v227 = vadd.f32 %v159, %v205
    %v228 = vadd.f32 %v160, %v209
    %v229 = vadd.f32 %v161, %v213
    %v230 = vadd.f32 %v162, %v201
    %v231 = vadd.f32 %v163, %v205
    %v232 = vadd.f32 %v164, %v209
    %v233 = vadd.f32 %v165, %v213
    %v234 = vadd.f32 %v166, %v201
    %v235 = vadd.f32 %v167, %v205
    %v236 = vadd.f32 %v168, %v209
    %v237 = vadd.f32 %v169, %v213
    %v238 = vadd.f32 %v170, %v201
    %v239 = vadd.f32 %v171, %v205
    %v240 = vadd.f32 %v172, %v209
    %v241 = vadd.f32 %v173, %v213
    %v242 = vadd.f32 %v174, %v201
    %v243 = vadd.f32 %v175, %v205
    %v244 = vadd.f32 %v176, %v209
    %v245 = vadd.f32 %v177, %v213
    %v278 = vcombine.low %v214, %v215
    %v279 = vcombine.low %v216, %v217
    %v280 = vcombine.low %v218, %v219
    %v281 = vcombine.low %v220, %v221
    %v282 = vcombine.low %v222, %v223
    %v283 = vcombine.low %v224, %v225
    %v284 = vcombine.low %v226, %v227
    %v285 = vcombine.low %v228, %v229
    %v286 = vcombine.low %v230, %v231
    %v287 = vcombine.low %v232, %v233
    %v288 = vcombine.low %v234, %v235
    %v289 = vcombine.low %v236, %v237
    %v290 = vcombine.low %v238, %v239
    %v291 = vcombine.low %v240, %v241
    %v292 = vcombine.low %v242, %v243
    %v293 = vcombine.low %v244, %v245
    %310 = vst [vmem:[#allocation2] sm:$0xff] %v278
    %311 = vst [vmem:[#allocation2 + $0x8] sm:$0xff] %v279
    %312 = vst [vmem:[#allocation2 + $0x10] sm:$0xff] %v280
    %313 = vst [vmem:[#allocation2 + $0x18] sm:$0xff] %v281
    %314 = vst [vmem:[#allocation2 + $0x20] sm:$0xff] %v282
    %315 = vst [vmem:[#allocation2 + $0x28] sm:$0xff] %v283
    %316 = vst [vmem:[#allocation2 + $0x30] sm:$0xff] %v284
    %317 = vst [vmem:[#allocation2 + $0x38] sm:$0xff] %v285
    %318 = vst [vmem:[#allocation2 + $0x40] sm:$0xff] %v286
    %319 = vst [vmem:[#allocation2 + $0x48] sm:$0xff] %v287
    %320 = vst [vmem:[#allocation2 + $0x50] sm:$0xff] %v288
    %321 = vst [vmem:[#allocation2 + $0x58] sm:$0xff] %v289
    %322 = vst [vmem:[#allocation2 + $0x60] sm:$0xff] %v290
    %323 = vst [vmem:[#allocation2 + $0x68] sm:$0xff] %v291
    %324 = vst [vmem:[#allocation2 + $0x70] sm:$0xff] %v292
    %325 = vst [vmem:[#allocation2 + $0x78] sm:$0xff] %v293
    %v326 = vld [vmem:[#allocation6] sm:$0xff]
    %v327 = vld [vmem:[#allocation6 + $0x8] sm:$0xff]
    %v328 = vld [vmem:[#allocation6 + $0x10] sm:$0xff]
    %v329 = vld [vmem:[#allocation6 + $0x18] sm:$0xff]
    %v330 = vld [vmem:[#allocation6 + $0x20] sm:$0xff]
    %v331 = vld [vmem:[#allocation6 + $0x28] sm:$0xff]
    %v332 = vld [vmem:[#allocation6 + $0x30] sm:$0xff]
    %v333 = vld [vmem:[#allocation6 + $0x38] sm:$0xff]
    %v334 = vld [vmem:[#allocation6 + $0x40] sm:$0xff]
    %v335 = vld [vmem:[#allocation6 + $0x48] sm:$0xff]
    %v336 = vld [vmem:[#allocation6 + $0x50] sm:$0xff]
    %v337 = vld [vmem:[#allocation6 + $0x58] sm:$0xff]
    %v338 = vld [vmem:[#allocation4] sm:$0xf]
    %v339 = vld [vmem:[#allocation5] sm:$0xf]
    %v340 = vld [vmem:[#allocation2] sm:$0xff]
    %v341 = vld [vmem:[#allocation2 + $0x8] sm:$0xff]
    %v344 = vcombine.high %v340, %v340
    %v345 = vcombine.high %v341, %v341
    %vm348 = vcmask 195584
    %v350 = vsel %vm348, %v338, 0
    %352 = vmatprep.subr.mxu0 0.0
    %353 = vmatpush1.msra.mxu0 0.0
    %354 = vmatprep.subr.mxu0 0.0
    %355 = vmatpush1.msra.mxu0 0.0
    %356 = vmatprep.subr.mxu0 0.0
    %357 = vmatpush1.msra.mxu0 0.0
    %358 = vmatprep.subr.mxu0 0.0
    %359 = vmatpush1.msra.mxu0 0.0
    %360 = vmatprep.subr.mxu0 0.0
    %361 = vmatpush1.msra.mxu0 0.0
    %362 = vmatprep.subr.mxu0 0.0
    %363 = vmatpush1.msra.mxu0 0.0
    %364 = vmatprep.subr.mxu0 0.0
    %365 = vmatpush1.msra.mxu0 0.0
    %366 = vmatprep.subr.mxu0 0.0
    %367 = vmatpush1.msra.mxu0 0.0
    %368 = vmatprep.subr.mxu0 0.0
    %369 = vmatpush1.msra.mxu0 0.0
    %370 = vmatprep.subr.mxu0 0.0
    %371 = vmatpush1.msra.mxu0 0.0
    %372 = vmatprep.subr.mxu0 0.0
    %373 = vmatpush1.msra.mxu0 0.0
    %374 = vmatprep.subr.mxu0 0.0
    %375 = vmatpush1.msra.mxu0 0.0
    %376 = vmatprep.subr.mxu0 0.0
    %377 = vmatpush1.msra.mxu0 0.0
    %378 = vmatprep.subr.mxu0 %v335
    %379 = vmatpush1.msra.mxu0 %v334
    %380 = vmatprep.subr.mxu0 %v331
    %381 = vmatpush1.msra.mxu0 %v330
    %382 = vmatprep.subr.mxu0 %v327
    %383 = vmatpush1.msra.mxu0 %v326
    %384 = vmatprep.subr.mxu0 0.0
    %385 = vmatpush2.msra.mxu0 0.0
    %386 = vmatprep.subr.mxu0 0.0
    %387 = vmatpush2.msra.mxu0 0.0
    %388 = vmatprep.subr.mxu0 0.0
    %389 = vmatpush2.msra.mxu0 0.0
    %390 = vmatprep.subr.mxu0 0.0
    %391 = vmatpush2.msra.mxu0 0.0
    %392 = vmatprep.subr.mxu0 0.0
    %393 = vmatpush2.msra.mxu0 0.0
    %394 = vmatprep.subr.mxu0 0.0
    %395 = vmatpush2.msra.mxu0 0.0
    %396 = vmatprep.subr.mxu0 0.0
    %397 = vmatpush2.msra.mxu0 0.0
    %398 = vmatprep.subr.mxu0 0.0
    %399 = vmatpush2.msra.mxu0 0.0
    %400 = vmatprep.subr.mxu0 0.0
    %401 = vmatpush2.msra.mxu0 0.0
    %402 = vmatprep.subr.mxu0 0.0
    %403 = vmatpush2.msra.mxu0 0.0
    %404 = vmatprep.subr.mxu0 0.0
    %405 = vmatpush2.msra.mxu0 0.0
    %406 = vmatprep.subr.mxu0 0.0
    %407 = vmatpush2.msra.mxu0 0.0
    %408 = vmatprep.subr.mxu0 0.0
    %409 = vmatpush2.msra.mxu0 0.0
    %410 = vmatprep.subr.mxu0 0.0
    %411 = vmatpush2.msra.mxu0 0.0
    %412 = vmatprep.subr.mxu0 0.0
    %413 = vmatpush2.msra.mxu0 0.0
    %414 = vmatprep.subr.mxu0 0.0
    %415 = vmatpush2.msra.mxu0 0.0
    %416 = vmatprep.mubr.f32.mxu0 0.0
    %417 = vmatmul.mubr.f32.gmra.mxu0 %v350
    %v418 = vpop.f32.mrf.mxu0
    %v419 = vadd.f32 %v340, %v418
    %v420 = vpop.f32.mrf.mxu0
    %v421 = vadd.f32 %v344, %v420
    %422 = vdwg.mxu0
    %423 = vmatprep.subr.mxu0 0.0
    %424 = vmatpush1.msra.mxu0 0.0
    %425 = vmatprep.subr.mxu0 0.0
    %426 = vmatpush1.msra.mxu0 0.0
    %427 = vmatprep.subr.mxu0 0.0
    %428 = vmatpush1.msra.mxu0 0.0
    %429 = vmatprep.subr.mxu0 0.0
    %430 = vmatpush1.msra.mxu0 0.0
    %431 = vmatprep.subr.mxu0 0.0
    %432 = vmatpush1.msra.mxu0 0.0
    %433 = vmatprep.subr.mxu0 0.0
    %434 = vmatpush1.msra.mxu0 0.0
    %435 = vmatprep.subr.mxu0 0.0
    %436 = vmatpush1.msra.mxu0 0.0
    %437 = vmatprep.subr.mxu0 0.0
    %438 = vmatpush1.msra.mxu0 0.0
    %439 = vmatprep.subr.mxu0 0.0
    %440 = vmatpush1.msra.mxu0 0.0
    %441 = vmatprep.subr.mxu0 0.0
    %442 = vmatpush1.msra.mxu0 0.0
    %443 = vmatprep.subr.mxu0 0.0
    %444 = vmatpush1.msra.mxu0 0.0
    %445 = vmatprep.subr.mxu0 0.0
    %446 = vmatpush1.msra.mxu0 0.0
    %447 = vmatprep.subr.mxu0 0.0
    %448 = vmatpush1.msra.mxu0 0.0
    %449 = vmatprep.subr.mxu0 %v337
    %450 = vmatpush1.msra.mxu0 %v336
    %451 = vmatprep.subr.mxu0 %v333
    %452 = vmatpush1.msra.mxu0 %v332
    %453 = vmatprep.subr.mxu0 %v329
    %454 = vmatpush1.msra.mxu0 %v328
    %455 = vmatprep.subr.mxu0 0.0
    %456 = vmatpush2.msra.mxu0 0.0
    %457 = vmatprep.subr.mxu0 0.0
    %458 = vmatpush2.msra.mxu0 0.0
    %459 = vmatprep.subr.mxu0 0.0
    %460 = vmatpush2.msra.mxu0 0.0
    %461 = vmatprep.subr.mxu0 0.0
    %462 = vmatpush2.msra.mxu0 0.0
    %463 = vmatprep.subr.mxu0 0.0
    %464 = vmatpush2.msra.mxu0 0.0
    %465 = vmatprep.subr.mxu0 0.0
    %466 = vmatpush2.msra.mxu0 0.0
    %467 = vmatprep.subr.mxu0 0.0
    %468 = vmatpush2.msra.mxu0 0.0
    %469 = vmatprep.subr.mxu0 0.0
    %470 = vmatpush2.msra.mxu0 0.0
    %471 = vmatprep.subr.mxu0 0.0
    %472 = vmatpush2.msra.mxu0 0.0
    %473 = vmatprep.subr.mxu0 0.0
    %474 = vmatpush2.msra.mxu0 0.0
    %475 = vmatprep.subr.mxu0 0.0
    %476 = vmatpush2.msra.mxu0 0.0
    %477 = vmatprep.subr.mxu0 0.0
    %478 = vmatpush2.msra.mxu0 0.0
    %479 = vmatprep.subr.mxu0 0.0
    %480 = vmatpush2.msra.mxu0 0.0
    %481 = vmatprep.subr.mxu0 0.0
    %482 = vmatpush2.msra.mxu0 0.0
    %483 = vmatprep.subr.mxu0 0.0
    %484 = vmatpush2.msra.mxu0 0.0
    %485 = vmatprep.subr.mxu0 0.0
    %486 = vmatpush2.msra.mxu0 0.0
    %487 = vmatprep.mubr.f32.mxu0 0.0
    %488 = vmatmul.mubr.f32.gmra.mxu0 %v350
    %v489 = vpop.f32.mrf.mxu0
    %v490 = vadd.f32 %v341, %v489
    %v491 = vpop.f32.mrf.mxu0
    %v492 = vadd.f32 %v345, %v491
    %493 = vdwg.mxu0
    %v494 = vxor.u32 %v419, 2147483648
    %v495 = vmul.f32 %v494, 1.442695
    %v496 = vpow.pop %v495
    %v497 = vadd.f32 %v496, 1.0
    %v498 = vrcp.pop %v497
    %v499 = vmul.f32 1.0, %v498
    %v500 = vxor.u32 %v421, 2147483648
    %v501 = vmul.f32 %v500, 1.442695
    %v502 = vpow.pop %v501
    %v503 = vadd.f32 %v502, 1.0
    %v504 = vrcp.pop %v503
    %v505 = vmul.f32 1.0, %v504
    %v506 = vtanh.pop %v490
    %v507 = vxor.u32 %v492, 2147483648
    %v508 = vmul.f32 %v507, 1.442695
    %v509 = vpow.pop %v508
    %v510 = vadd.f32 %v509, 1.0
    %v511 = vrcp.pop %v510
    %v512 = vmul.f32 1.0, %v511
    %v513 = vmul.f32 %v505, %v339
    %v514 = vmul.f32 %v499, %v506
    %v515 = vadd.f32 %v513, %v514
    %v516 = vtanh.pop %v515
    %v517 = vmul.f32 %v512, %v516
    %vm518 = vcmask 191488
    %519 = vst.msk [vmem:[#allocation3] sm:$0xf] %vm518, %v517
    %s520 = scalar_lea.vmem [#allocation2], 16
    %v521 = vld [vmem:[%s520] sm:$0xff]
    %v522 = vld [vmem:[%s520 + $0x8] sm:$0xff]
    %v525 = vcombine.high %v521, %v521
    %v526 = vcombine.high %v522, %v522
    %v530 = vsel %vm348, %v517, 0
    %532 = vmatprep.subr.mxu0 0.0
    %533 = vmatpush1.msra.mxu0 0.0
    %534 = vmatprep.subr.mxu0 0.0
    %535 = vmatpush1.msra.mxu0 0.0
    %536 = vmatprep.subr.mxu0 0.0
    %537 = vmatpush1.msra.mxu0 0.0
    %538 = vmatprep.subr.mxu0 0.0
    %539 = vmatpush1.msra.mxu0 0.0
    %540 = vmatprep.subr.mxu0 0.0
    %541 = vmatpush1.msra.mxu0 0.0
    %542 = vmatprep.subr.mxu0 0.0
    %543 = vmatpush1.msra.mxu0 0.0
    %544 = vmatprep.subr.mxu0 0.0
    %545 = vmatpush1.msra.mxu0 0.0
    %546 = vmatprep.subr.mxu0 0.0
    %547 = vmatpush1.msra.mxu0 0.0
    %548 = vmatprep.subr.mxu0 0.0
    %549 = vmatpush1.msra.mxu0 0.0
    %550 = vmatprep.subr.mxu0 0.0
    %551 = vmatpush1.msra.mxu0 0.0
    %552 = vmatprep.subr.mxu0 0.0
    %553 = vmatpush1.msra.mxu0 0.0
    %554 = vmatprep.subr.mxu0 0.0
    %555 = vmatpush1.msra.mxu0 0.0
    %556 = vmatprep.subr.mxu0 0.0
    %557 = vmatpush1.msra.mxu0 0.0
    %558 = vmatprep.subr.mxu0 %v335
    %559 = vmatpush1.msra.mxu0 %v334
    %560 = vmatprep.subr.mxu0 %v331
    %561 = vmatpush1.msra.mxu0 %v330
    %562 = vmatprep.subr.mxu0 %v327
    %563 = vmatpush1.msra.mxu0 %v326
    %564 = vmatprep.subr.mxu0 0.0
    %565 = vmatpush2.msra.mxu0 0.0
    %566 = vmatprep.subr.mxu0 0.0
    %567 = vmatpush2.msra.mxu0 0.0
    %568 = vmatprep.subr.mxu0 0.0
    %569 = vmatpush2.msra.mxu0 0.0
    %570 = vmatprep.subr.mxu0 0.0
    %571 = vmatpush2.msra.mxu0 0.0
    %572 = vmatprep.subr.mxu0 0.0
    %573 = vmatpush2.msra.mxu0 0.0
    %574 = vmatprep.subr.mxu0 0.0
    %575 = vmatpush2.msra.mxu0 0.0
    %576 = vmatprep.subr.mxu0 0.0
    %577 = vmatpush2.msra.mxu0 0.0
    %578 = vmatprep.subr.mxu0 0.0
    %579 = vmatpush2.msra.mxu0 0.0
    %580 = vmatprep.subr.mxu0 0.0
    %581 = vmatpush2.msra.mxu0 0.0
    %582 = vmatprep.subr.mxu0 0.0
    %583 = vmatpush2.msra.mxu0 0.0
    %584 = vmatprep.subr.mxu0 0.0
    %585 = vmatpush2.msra.mxu0 0.0
    %586 = vmatprep.subr.mxu0 0.0
    %587 = vmatpush2.msra.mxu0 0.0
    %588 = vmatprep.subr.mxu0 0.0
    %589 = vmatpush2.msra.mxu0 0.0
    %590 = vmatprep.subr.mxu0 0.0
    %591 = vmatpush2.msra.mxu0 0.0
    %592 = vmatprep.subr.mxu0 0.0
    %593 = vmatpush2.msra.mxu0 0.0
    %594 = vmatprep.subr.mxu0 0.0
    %595 = vmatpush2.msra.mxu0 0.0
    %596 = vmatprep.mubr.f32.mxu0 0.0
    %597 = vmatmul.mubr.f32.gmra.mxu0 %v530
    %v598 = vpop.f32.mrf.mxu0
    %v599 = vadd.f32 %v521, %v598
    %v600 = vpop.f32.mrf.mxu0
    %v601 = vadd.f32 %v525, %v600
    %602 = vdwg.mxu0
    %603 = vmatprep.subr.mxu0 0.0
    %604 = vmatpush1.msra.mxu0 0.0
    %605 = vmatprep.subr.mxu0 0.0
    %606 = vmatpush1.msra.mxu0 0.0
    %607 = vmatprep.subr.mxu0 0.0
    %608 = vmatpush1.msra.mxu0 0.0
    %609 = vmatprep.subr.mxu0 0.0
    %610 = vmatpush1.msra.mxu0 0.0
    %611 = vmatprep.subr.mxu0 0.0
    %612 = vmatpush1.msra.mxu0 0.0
    %613 = vmatprep.subr.mxu0 0.0
    %614 = vmatpush1.msra.mxu0 0.0
    %615 = vmatprep.subr.mxu0 0.0
    %616 = vmatpush1.msra.mxu0 0.0
    %617 = vmatprep.subr.mxu0 0.0
    %618 = vmatpush1.msra.mxu0 0.0
    %619 = vmatprep.subr.mxu0 0.0
    %620 = vmatpush1.msra.mxu0 0.0
    %621 = vmatprep.subr.mxu0 0.0
    %622 = vmatpush1.msra.mxu0 0.0
    %623 = vmatprep.subr.mxu0 0.0
    %624 = vmatpush1.msra.mxu0 0.0
    %625 = vmatprep.subr.mxu0 0.0
    %626 = vmatpush1.msra.mxu0 0.0
    %627 = vmatprep.subr.mxu0 0.0
    %628 = vmatpush1.msra.mxu0 0.0
    %629 = vmatprep.subr.mxu0 %v337
    %630 = vmatpush1.msra.mxu0 %v336
    %631 = vmatprep.subr.mxu0 %v333
    %632 = vmatpush1.msra.mxu0 %v332
    %633 = vmatprep.subr.mxu0 %v329
    %634 = vmatpush1.msra.mxu0 %v328
    %635 = vmatprep.subr.mxu0 0.0
    %636 = vmatpush2.msra.mxu0 0.0
    %637 = vmatprep.subr.mxu0 0.0
    %638 = vmatpush2.msra.mxu0 0.0
    %639 = vmatprep.subr.mxu0 0.0
    %640 = vmatpush2.msra.mxu0 0.0
    %641 = vmatprep.subr.mxu0 0.0
    %642 = vmatpush2.msra.mxu0 0.0
    %643 = vmatprep.subr.mxu0 0.0
    %644 = vmatpush2.msra.mxu0 0.0
    %645 = vmatprep.subr.mxu0 0.0
    %646 = vmatpush2.msra.mxu0 0.0
    %647 = vmatprep.subr.mxu0 0.0
    %648 = vmatpush2.msra.mxu0 0.0
    %649 = vmatprep.subr.mxu0 0.0
    %650 = vmatpush2.msra.mxu0 0.0
    %651 = vmatprep.subr.mxu0 0.0
    %652 = vmatpush2.msra.mxu0 0.0
    %653 = vmatprep.subr.mxu0 0.0
    %654 = vmatpush2.msra.mxu0 0.0
    %655 = vmatprep.subr.mxu0 0.0
    %656 = vmatpush2.msra.mxu0 0.0
    %657 = vmatprep.subr.mxu0 0.0
    %658 = vmatpush2.msra.mxu0 0.0
    %659 = vmatprep.subr.mxu0 0.0
    %660 = vmatpush2.msra.mxu0 0.0
    %661 = vmatprep.subr.mxu0 0.0
    %662 = vmatpush2.msra.mxu0 0.0
    %663 = vmatprep.subr.mxu0 0.0
    %664 = vmatpush2.msra.mxu0 0.0
    %665 = vmatprep.subr.mxu0 0.0
    %666 = vmatpush2.msra.mxu0 0.0
    %667 = vmatprep.mubr.f32.mxu0 0.0
    %668 = vmatmul.mubr.f32.gmra.mxu0 %v530
    %v669 = vpop.f32.mrf.mxu0
    %v670 = vadd.f32 %v522, %v669
    %v671 = vpop.f32.mrf.mxu0
    %v672 = vadd.f32 %v526, %v671
    %673 = vdwg.mxu0
    %v674 = vxor.u32 %v599, 2147483648
    %v675 = vmul.f32 %v674, 1.442695
    %v676 = vpow.pop %v675
    %v677 = vadd.f32 %v676, 1.0
    %v678 = vrcp.pop %v677
    %v679 = vmul.f32 1.0, %v678
    %v680 = vxor.u32 %v601, 2147483648
    %v681 = vmul.f32 %v680, 1.442695
    %v682 = vpow.pop %v681
    %v683 = vadd.f32 %v682, 1.0
    %v684 = vrcp.pop %v683
    %v685 = vmul.f32 1.0, %v684
    %v686 = vtanh.pop %v670
    %v687 = vxor.u32 %v672, 2147483648
    %v688 = vmul.f32 %v687, 1.442695
    %v689 = vpow.pop %v688
    %v690 = vadd.f32 %v689, 1.0
    %v691 = vrcp.pop %v690
    %v692 = vmul.f32 1.0, %v691
    %v693 = vmul.f32 %v685, %v515
    %v694 = vmul.f32 %v679, %v686
    %v695 = vadd.f32 %v693, %v694
    %v696 = vtanh.pop %v695
    %v697 = vmul.f32 %v692, %v696
    %s698 = scalar_lea.vmem [#allocation3], 4
    %699 = vst.msk [vmem:[%s698] sm:$0xf] %vm518, %v697
    %s700 = scalar_lea.vmem [#allocation2], 32
    %v701 = vld [vmem:[%s700] sm:$0xff]
    %v702 = vld [vmem:[%s700 + $0x8] sm:$0xff]
    %v705 = vcombine.high %v701, %v701
    %v706 = vcombine.high %v702, %v702
    %v710 = vsel %vm348, %v697, 0
    %712 = vmatprep.subr.mxu0 0.0
    %713 = vmatpush1.msra.mxu0 0.0
    %714 = vmatprep.subr.mxu0 0.0
    %715 = vmatpush1.msra.mxu0 0.0
    %716 = vmatprep.subr.mxu0 0.0
    %717 = vmatpush1.msra.mxu0 0.0
    %718 = vmatprep.subr.mxu0 0.0
    %719 = vmatpush1.msra.mxu0 0.0
    %720 = vmatprep.subr.mxu0 0.0
    %721 = vmatpush1.msra.mxu0 0.0
    %722 = vmatprep.subr.mxu0 0.0
    %723 = vmatpush1.msra.mxu0 0.0
    %724 = vmatprep.subr.mxu0 0.0
    %725 = vmatpush1.msra.mxu0 0.0
    %726 = vmatprep.subr.mxu0 0.0
    %727 = vmatpush1.msra.mxu0 0.0
    %728 = vmatprep.subr.mxu0 0.0
    %729 = vmatpush1.msra.mxu0 0.0
    %730 = vmatprep.subr.mxu0 0.0
    %731 = vmatpush1.msra.mxu0 0.0
    %732 = vmatprep.subr.mxu0 0.0
    %733 = vmatpush1.msra.mxu0 0.0
    %734 = vmatprep.subr.mxu0 0.0
    %735 = vmatpush1.msra.mxu0 0.0
    %736 = vmatprep.subr.mxu0 0.0
    %737 = vmatpush1.msra.mxu0 0.0
    %738 = vmatprep.subr.mxu0 %v335
    %739 = vmatpush1.msra.mxu0 %v334
    %740 = vmatprep.subr.mxu0 %v331
    %741 = vmatpush1.msra.mxu0 %v330
    %742 = vmatprep.subr.mxu0 %v327
    %743 = vmatpush1.msra.mxu0 %v326
    %744 = vmatprep.subr.mxu0 0.0
    %745 = vmatpush2.msra.mxu0 0.0
    %746 = vmatprep.subr.mxu0 0.0
    %747 = vmatpush2.msra.mxu0 0.0
    %748 = vmatprep.subr.mxu0 0.0
    %749 = vmatpush2.msra.mxu0 0.0
    %750 = vmatprep.subr.mxu0 0.0
    %751 = vmatpush2.msra.mxu0 0.0
    %752 = vmatprep.subr.mxu0 0.0
    %753 = vmatpush2.msra.mxu0 0.0
    %754 = vmatprep.subr.mxu0 0.0
    %755 = vmatpush2.msra.mxu0 0.0
    %756 = vmatprep.subr.mxu0 0.0
    %757 = vmatpush2.msra.mxu0 0.0
    %758 = vmatprep.subr.mxu0 0.0
    %759 = vmatpush2.msra.mxu0 0.0
    %760 = vmatprep.subr.mxu0 0.0
    %761 = vmatpush2.msra.mxu0 0.0
    %762 = vmatprep.subr.mxu0 0.0
    %763 = vmatpush2.msra.mxu0 0.0
    %764 = vmatprep.subr.mxu0 0.0
    %765 = vmatpush2.msra.mxu0 0.0
    %766 = vmatprep.subr.mxu0 0.0
    %767 = vmatpush2.msra.mxu0 0.0
    %768 = vmatprep.subr.mxu0 0.0
    %769 = vmatpush2.msra.mxu0 0.0
    %770 = vmatprep.subr.mxu0 0.0
    %771 = vmatpush2.msra.mxu0 0.0
    %772 = vmatprep.subr.mxu0 0.0
    %773 = vmatpush2.msra.mxu0 0.0
    %774 = vmatprep.subr.mxu0 0.0
    %775 = vmatpush2.msra.mxu0 0.0
    %776 = vmatprep.mubr.f32.mxu0 0.0
    %777 = vmatmul.mubr.f32.gmra.mxu0 %v710
    %v778 = vpop.f32.mrf.mxu0
    %v779 = vadd.f32 %v701, %v778
    %v780 = vpop.f32.mrf.mxu0
    %v781 = vadd.f32 %v705, %v780
    %782 = vdwg.mxu0
    %783 = vmatprep.subr.mxu0 0.0
    %784 = vmatpush1.msra.mxu0 0.0
    %785 = vmatprep.subr.mxu0 0.0
    %786 = vmatpush1.msra.mxu0 0.0
    %787 = vmatprep.subr.mxu0 0.0
    %788 = vmatpush1.msra.mxu0 0.0
    %789 = vmatprep.subr.mxu0 0.0
    %790 = vmatpush1.msra.mxu0 0.0
    %791 = vmatprep.subr.mxu0 0.0
    %792 = vmatpush1.msra.mxu0 0.0
    %793 = vmatprep.subr.mxu0 0.0
    %794 = vmatpush1.msra.mxu0 0.0
    %795 = vmatprep.subr.mxu0 0.0
    %796 = vmatpush1.msra.mxu0 0.0
    %797 = vmatprep.subr.mxu0 0.0
    %798 = vmatpush1.msra.mxu0 0.0
    %799 = vmatprep.subr.mxu0 0.0
    %800 = vmatpush1.msra.mxu0 0.0
    %801 = vmatprep.subr.mxu0 0.0
    %802 = vmatpush1.msra.mxu0 0.0
    %803 = vmatprep.subr.mxu0 0.0
    %804 = vmatpush1.msra.mxu0 0.0
    %805 = vmatprep.subr.mxu0 0.0
    %806 = vmatpush1.msra.mxu0 0.0
    %807 = vmatprep.subr.mxu0 0.0
    %808 = vmatpush1.msra.mxu0 0.0
    %809 = vmatprep.subr.mxu0 %v337
    %810 = vmatpush1.msra.mxu0 %v336
    %811 = vmatprep.subr.mxu0 %v333
    %812 = vmatpush1.msra.mxu0 %v332
    %813 = vmatprep.subr.mxu0 %v329
    %814 = vmatpush1.msra.mxu0 %v328
    %815 = vmatprep.subr.mxu0 0.0
    %816 = vmatpush2.msra.mxu0 0.0
    %817 = vmatprep.subr.mxu0 0.0
    %818 = vmatpush2.msra.mxu0 0.0
    %819 = vmatprep.subr.mxu0 0.0
    %820 = vmatpush2.msra.mxu0 0.0
    %821 = vmatprep.subr.mxu0 0.0
    %822 = vmatpush2.msra.mxu0 0.0
    %823 = vmatprep.subr.mxu0 0.0
    %824 = vmatpush2.msra.mxu0 0.0
    %825 = vmatprep.subr.mxu0 0.0
    %826 = vmatpush2.msra.mxu0 0.0
    %827 = vmatprep.subr.mxu0 0.0
    %828 = vmatpush2.msra.mxu0 0.0
    %829 = vmatprep.subr.mxu0 0.0
    %830 = vmatpush2.msra.mxu0 0.0
    %831 = vmatprep.subr.mxu0 0.0
    %832 = vmatpush2.msra.mxu0 0.0
    %833 = vmatprep.subr.mxu0 0.0
    %834 = vmatpush2.msra.mxu0 0.0
    %835 = vmatprep.subr.mxu0 0.0
    %836 = vmatpush2.msra.mxu0 0.0
    %837 = vmatprep.subr.mxu0 0.0
    %838 = vmatpush2.msra.mxu0 0.0
    %839 = vmatprep.subr.mxu0 0.0
    %840 = vmatpush2.msra.mxu0 0.0
    %841 = vmatprep.subr.mxu0 0.0
    %842 = vmatpush2.msra.mxu0 0.0
    %843 = vmatprep.subr.mxu0 0.0
    %844 = vmatpush2.msra.mxu0 0.0
    %845 = vmatprep.subr.mxu0 0.0
    %846 = vmatpush2.msra.mxu0 0.0
    %847 = vmatprep.mubr.f32.mxu0 0.0
    %848 = vmatmul.mubr.f32.gmra.mxu0 %v710
    %v849 = vpop.f32.mrf.mxu0
    %v850 = vadd.f32 %v702, %v849
    %v851 = vpop.f32.mrf.mxu0
    %v852 = vadd.f32 %v706, %v851
    %853 = vdwg.mxu0
    %v854 = vxor.u32 %v779, 2147483648
    %v855 = vmul.f32 %v854, 1.442695
    %v856 = vpow.pop %v855
    %v857 = vadd.f32 %v856, 1.0
    %v858 = vrcp.pop %v857
    %v859 = vmul.f32 1.0, %v858
    %v860 = vxor.u32 %v781, 2147483648
    %v861 = vmul.f32 %v860, 1.442695
    %v862 = vpow.pop %v861
    %v863 = vadd.f32 %v862, 1.0
    %v864 = vrcp.pop %v863
    %v865 = vmul.f32 1.0, %v864
    %v866 = vtanh.pop %v850
    %v867 = vxor.u32 %v852, 2147483648
    %v868 = vmul.f32 %v867, 1.442695
    %v869 = vpow.pop %v868
    %v870 = vadd.f32 %v869, 1.0
    %v871 = vrcp.pop %v870
    %v872 = vmul.f32 1.0, %v871
    %v873 = vmul.f32 %v865, %v695
    %v874 = vmul.f32 %v859, %v866
    %v875 = vadd.f32 %v873, %v874
    %v876 = vtanh.pop %v875
    %v877 = vmul.f32 %v872, %v876
    %s878 = scalar_lea.vmem [#allocation3], 8
    %879 = vst.msk [vmem:[%s878] sm:$0xf] %vm518, %v877
    %s880 = scalar_lea.vmem [#allocation2], 48
    %v881 = vld [vmem:[%s880] sm:$0xff]
    %v882 = vld [vmem:[%s880 + $0x8] sm:$0xff]
    %v885 = vcombine.high %v881, %v881
    %v886 = vcombine.high %v882, %v882
    %v890 = vsel %vm348, %v877, 0
    %892 = vmatprep.subr.mxu0 0.0
    %893 = vmatpush1.msra.mxu0 0.0
    %894 = vmatprep.subr.mxu0 0.0
    %895 = vmatpush1.msra.mxu0 0.0
    %896 = vmatprep.subr.mxu0 0.0
    %897 = vmatpush1.msra.mxu0 0.0
    %898 = vmatprep.subr.mxu0 0.0
    %899 = vmatpush1.msra.mxu0 0.0
    %900 = vmatprep.subr.mxu0 0.0
    %901 = vmatpush1.msra.mxu0 0.0
    %902 = vmatprep.subr.mxu0 0.0
    %903 = vmatpush1.msra.mxu0 0.0
    %904 = vmatprep.subr.mxu0 0.0
    %905 = vmatpush1.msra.mxu0 0.0
    %906 = vmatprep.subr.mxu0 0.0
    %907 = vmatpush1.msra.mxu0 0.0
    %908 = vmatprep.subr.mxu0 0.0
    %909 = vmatpush1.msra.mxu0 0.0
    %910 = vmatprep.subr.mxu0 0.0
    %911 = vmatpush1.msra.mxu0 0.0
    %912 = vmatprep.subr.mxu0 0.0
    %913 = vmatpush1.msra.mxu0 0.0
    %914 = vmatprep.subr.mxu0 0.0
    %915 = vmatpush1.msra.mxu0 0.0
    %916 = vmatprep.subr.mxu0 0.0
    %917 = vmatpush1.msra.mxu0 0.0
    %918 = vmatprep.subr.mxu0 %v335
    %919 = vmatpush1.msra.mxu0 %v334
    %920 = vmatprep.subr.mxu0 %v331
    %921 = vmatpush1.msra.mxu0 %v330
    %922 = vmatprep.subr.mxu0 %v327
    %923 = vmatpush1.msra.mxu0 %v326
    %924 = vmatprep.subr.mxu0 0.0
    %925 = vmatpush2.msra.mxu0 0.0
    %926 = vmatprep.subr.mxu0 0.0
    %927 = vmatpush2.msra.mxu0 0.0
    %928 = vmatprep.subr.mxu0 0.0
    %929 = vmatpush2.msra.mxu0 0.0
    %930 = vmatprep.subr.mxu0 0.0
    %931 = vmatpush2.msra.mxu0 0.0
    %932 = vmatprep.subr.mxu0 0.0
    %933 = vmatpush2.msra.mxu0 0.0
    %934 = vmatprep.subr.mxu0 0.0
    %935 = vmatpush2.msra.mxu0 0.0
    %936 = vmatprep.subr.mxu0 0.0
    %937 = vmatpush2.msra.mxu0 0.0
    %938 = vmatprep.subr.mxu0 0.0
    %939 = vmatpush2.msra.mxu0 0.0
    %940 = vmatprep.subr.mxu0 0.0
    %941 = vmatpush2.msra.mxu0 0.0
    %942 = vmatprep.subr.mxu0 0.0
    %943 = vmatpush2.msra.mxu0 0.0
    %944 = vmatprep.subr.mxu0 0.0
    %945 = vmatpush2.msra.mxu0 0.0
    %946 = vmatprep.subr.mxu0 0.0
    %947 = vmatpush2.msra.mxu0 0.0
    %948 = vmatprep.subr.mxu0 0.0
    %949 = vmatpush2.msra.mxu0 0.0
    %950 = vmatprep.subr.mxu0 0.0
    %951 = vmatpush2.msra.mxu0 0.0
    %952 = vmatprep.subr.mxu0 0.0
    %953 = vmatpush2.msra.mxu0 0.0
    %954 = vmatprep.subr.mxu0 0.0
    %955 = vmatpush2.msra.mxu0 0.0
    %956 = vmatprep.mubr.f32.mxu0 0.0
    %957 = vmatmul.mubr.f32.gmra.mxu0 %v890
    %v958 = vpop.f32.mrf.mxu0
    %v959 = vadd.f32 %v881, %v958
    %v960 = vpop.f32.mrf.mxu0
    %v961 = vadd.f32 %v885, %v960
    %962 = vdwg.mxu0
    %963 = vmatprep.subr.mxu0 0.0
    %964 = vmatpush1.msra.mxu0 0.0
    %965 = vmatprep.subr.mxu0 0.0
    %966 = vmatpush1.msra.mxu0 0.0
    %967 = vmatprep.subr.mxu0 0.0
    %968 = vmatpush1.msra.mxu0 0.0
    %969 = vmatprep.subr.mxu0 0.0
    %970 = vmatpush1.msra.mxu0 0.0
    %971 = vmatprep.subr.mxu0 0.0
    %972 = vmatpush1.msra.mxu0 0.0
    %973 = vmatprep.subr.mxu0 0.0
    %974 = vmatpush1.msra.mxu0 0.0
    %975 = vmatprep.subr.mxu0 0.0
    %976 = vmatpush1.msra.mxu0 0.0
    %977 = vmatprep.subr.mxu0 0.0
    %978 = vmatpush1.msra.mxu0 0.0
    %979 = vmatprep.subr.mxu0 0.0
    %980 = vmatpush1.msra.mxu0 0.0
    %981 = vmatprep.subr.mxu0 0.0
    %982 = vmatpush1.msra.mxu0 0.0
    %983 = vmatprep.subr.mxu0 0.0
    %984 = vmatpush1.msra.mxu0 0.0
    %985 = vmatprep.subr.mxu0 0.0
    %986 = vmatpush1.msra.mxu0 0.0
    %987 = vmatprep.subr.mxu0 0.0
    %988 = vmatpush1.msra.mxu0 0.0
    %989 = vmatprep.subr.mxu0 %v337
    %990 = vmatpush1.msra.mxu0 %v336
    %991 = vmatprep.subr.mxu0 %v333
    %992 = vmatpush1.msra.mxu0 %v332
    %993 = vmatprep.subr.mxu0 %v329
    %994 = vmatpush1.msra.mxu0 %v328
    %995 = vmatprep.subr.mxu0 0.0
    %996 = vmatpush2.msra.mxu0 0.0
    %997 = vmatprep.subr.mxu0 0.0
    %998 = vmatpush2.msra.mxu0 0.0
    %999 = vmatprep.subr.mxu0 0.0
    %1000 = vmatpush2.msra.mxu0 0.0
    %1001 = vmatprep.subr.mxu0 0.0
    %1002 = vmatpush2.msra.mxu0 0.0
    %1003 = vmatprep.subr.mxu0 0.0
    %1004 = vmatpush2.msra.mxu0 0.0
    %1005 = vmatprep.subr.mxu0 0.0
    %1006 = vmatpush2.msra.mxu0 0.0
    %1007 = vmatprep.subr.mxu0 0.0
    %1008 = vmatpush2.msra.mxu0 0.0
    %1009 = vmatprep.subr.mxu0 0.0
    %1010 = vmatpush2.msra.mxu0 0.0
    %1011 = vmatprep.subr.mxu0 0.0
    %1012 = vmatpush2.msra.mxu0 0.0
    %1013 = vmatprep.subr.mxu0 0.0
    %1014 = vmatpush2.msra.mxu0 0.0
    %1015 = vmatprep.subr.mxu0 0.0
    %1016 = vmatpush2.msra.mxu0 0.0
    %1017 = vmatprep.subr.mxu0 0.0
    %1018 = vmatpush2.msra.mxu0 0.0
    %1019 = vmatprep.subr.mxu0 0.0
    %1020 = vmatpush2.msra.mxu0 0.0
    %1021 = vmatprep.subr.mxu0 0.0
    %1022 = vmatpush2.msra.mxu0 0.0
    %1023 = vmatprep.subr.mxu0 0.0
    %1024 = vmatpush2.msra.mxu0 0.0
    %1025 = vmatprep.subr.mxu0 0.0
    %1026 = vmatpush2.msra.mxu0 0.0
    %1027 = vmatprep.mubr.f32.mxu0 0.0
    %1028 = vmatmul.mubr.f32.gmra.mxu0 %v890
    %v1029 = vpop.f32.mrf.mxu0
    %v1030 = vadd.f32 %v882, %v1029
    %v1031 = vpop.f32.mrf.mxu0
    %v1032 = vadd.f32 %v886, %v1031
    %1033 = vdwg.mxu0
    %v1034 = vxor.u32 %v959, 2147483648
    %v1035 = vmul.f32 %v1034, 1.442695
    %v1036 = vpow.pop %v1035
    %v1037 = vadd.f32 %v1036, 1.0
    %v1038 = vrcp.pop %v1037
    %v1039 = vmul.f32 1.0, %v1038
    %v1040 = vxor.u32 %v961, 2147483648
    %v1041 = vmul.f32 %v1040, 1.442695
    %v1042 = vpow.pop %v1041
    %v1043 = vadd.f32 %v1042, 1.0
    %v1044 = vrcp.pop %v1043
    %v1045 = vmul.f32 1.0, %v1044
    %v1046 = vtanh.pop %v1030
    %v1047 = vxor.u32 %v1032, 2147483648
    %v1048 = vmul.f32 %v1047, 1.442695
    %v1049 = vpow.pop %v1048
    %v1050 = vadd.f32 %v1049, 1.0
    %v1051 = vrcp.pop %v1050
    %v1052 = vmul.f32 1.0, %v1051
    %v1053 = vmul.f32 %v1045, %v875
    %v1054 = vmul.f32 %v1039, %v1046
    %v1055 = vadd.f32 %v1053, %v1054
    %v1056 = vtanh.pop %v1055
    %v1057 = vmul.f32 %v1052, %v1056
    %s1058 = scalar_lea.vmem [#allocation3], 12
    %1059 = vst.msk [vmem:[%s1058] sm:$0xf] %vm518, %v1057
    %s1060 = scalar_lea.vmem [#allocation2], 64
    %v1061 = vld [vmem:[%s1060] sm:$0xff]
    %v1062 = vld [vmem:[%s1060 + $0x8] sm:$0xff]
    %v1065 = vcombine.high %v1061, %v1061
    %v1066 = vcombine.high %v1062, %v1062
    %v1070 = vsel %vm348, %v1057, 0
    %1072 = vmatprep.subr.mxu0 0.0
    %1073 = vmatpush1.msra.mxu0 0.0
    %1074 = vmatprep.subr.mxu0 0.0
    %1075 = vmatpush1.msra.mxu0 0.0
    %1076 = vmatprep.subr.mxu0 0.0
    %1077 = vmatpush1.msra.mxu0 0.0
    %1078 = vmatprep.subr.mxu0 0.0
    %1079 = vmatpush1.msra.mxu0 0.0
    %1080 = vmatprep.subr.mxu0 0.0
    %1081 = vmatpush1.msra.mxu0 0.0
    %1082 = vmatprep.subr.mxu0 0.0
    %1083 = vmatpush1.msra.mxu0 0.0
    %1084 = vmatprep.subr.mxu0 0.0
    %1085 = vmatpush1.msra.mxu0 0.0
    %1086 = vmatprep.subr.mxu0 0.0
    %1087 = vmatpush1.msra.mxu0 0.0
    %1088 = vmatprep.subr.mxu0 0.0
    %1089 = vmatpush1.msra.mxu0 0.0
    %1090 = vmatprep.subr.mxu0 0.0
    %1091 = vmatpush1.msra.mxu0 0.0
    %1092 = vmatprep.subr.mxu0 0.0
    %1093 = vmatpush1.msra.mxu0 0.0
    %1094 = vmatprep.subr.mxu0 0.0
    %1095 = vmatpush1.msra.mxu0 0.0
    %1096 = vmatprep.subr.mxu0 0.0
    %1097 = vmatpush1.msra.mxu0 0.0
    %1098 = vmatprep.subr.mxu0 %v335
    %1099 = vmatpush1.msra.mxu0 %v334
    %1100 = vmatprep.subr.mxu0 %v331
    %1101 = vmatpush1.msra.mxu0 %v330
    %1102 = vmatprep.subr.mxu0 %v327
    %1103 = vmatpush1.msra.mxu0 %v326
    %1104 = vmatprep.subr.mxu0 0.0
    %1105 = vmatpush2.msra.mxu0 0.0
    %1106 = vmatprep.subr.mxu0 0.0
    %1107 = vmatpush2.msra.mxu0 0.0
    %1108 = vmatprep.subr.mxu0 0.0
    %1109 = vmatpush2.msra.mxu0 0.0
    %1110 = vmatprep.subr.mxu0 0.0
    %1111 = vmatpush2.msra.mxu0 0.0
    %1112 = vmatprep.subr.mxu0 0.0
    %1113 = vmatpush2.msra.mxu0 0.0
    %1114 = vmatprep.subr.mxu0 0.0
    %1115 = vmatpush2.msra.mxu0 0.0
    %1116 = vmatprep.subr.mxu0 0.0
    %1117 = vmatpush2.msra.mxu0 0.0
    %1118 = vmatprep.subr.mxu0 0.0
    %1119 = vmatpush2.msra.mxu0 0.0
    %1120 = vmatprep.subr.mxu0 0.0
    %1121 = vmatpush2.msra.mxu0 0.0
    %1122 = vmatprep.subr.mxu0 0.0
    %1123 = vmatpush2.msra.mxu0 0.0
    %1124 = vmatprep.subr.mxu0 0.0
    %1125 = vmatpush2.msra.mxu0 0.0
    %1126 = vmatprep.subr.mxu0 0.0
    %1127 = vmatpush2.msra.mxu0 0.0
    %1128 = vmatprep.subr.mxu0 0.0
    %1129 = vmatpush2.msra.mxu0 0.0
    %1130 = vmatprep.subr.mxu0 0.0
    %1131 = vmatpush2.msra.mxu0 0.0
    %1132 = vmatprep.subr.mxu0 0.0
    %1133 = vmatpush2.msra.mxu0 0.0
    %1134 = vmatprep.subr.mxu0 0.0
    %1135 = vmatpush2.msra.mxu0 0.0
    %1136 = vmatprep.mubr.f32.mxu0 0.0
    %1137 = vmatmul.mubr.f32.gmra.mxu0 %v1070
    %v1138 = vpop.f32.mrf.mxu0
    %v1139 = vadd.f32 %v1061, %v1138
    %v1140 = vpop.f32.mrf.mxu0
    %v1141 = vadd.f32 %v1065, %v1140
    %1142 = vdwg.mxu0
    %1143 = vmatprep.subr.mxu0 0.0
    %1144 = vmatpush1.msra.mxu0 0.0
    %1145 = vmatprep.subr.mxu0 0.0
    %1146 = vmatpush1.msra.mxu0 0.0
    %1147 = vmatprep.subr.mxu0 0.0
    %1148 = vmatpush1.msra.mxu0 0.0
    %1149 = vmatprep.subr.mxu0 0.0
    %1150 = vmatpush1.msra.mxu0 0.0
    %1151 = vmatprep.subr.mxu0 0.0
    %1152 = vmatpush1.msra.mxu0 0.0
    %1153 = vmatprep.subr.mxu0 0.0
    %1154 = vmatpush1.msra.mxu0 0.0
    %1155 = vmatprep.subr.mxu0 0.0
    %1156 = vmatpush1.msra.mxu0 0.0
    %1157 = vmatprep.subr.mxu0 0.0
    %1158 = vmatpush1.msra.mxu0 0.0
    %1159 = vmatprep.subr.mxu0 0.0
    %1160 = vmatpush1.msra.mxu0 0.0
    %1161 = vmatprep.subr.mxu0 0.0
    %1162 = vmatpush1.msra.mxu0 0.0
    %1163 = vmatprep.subr.mxu0 0.0
    %1164 = vmatpush1.msra.mxu0 0.0
    %1165 = vmatprep.subr.mxu0 0.0
    %1166 = vmatpush1.msra.mxu0 0.0
    %1167 = vmatprep.subr.mxu0 0.0
    %1168 = vmatpush1.msra.mxu0 0.0
    %1169 = vmatprep.subr.mxu0 %v337
    %1170 = vmatpush1.msra.mxu0 %v336
    %1171 = vmatprep.subr.mxu0 %v333
    %1172 = vmatpush1.msra.mxu0 %v332
    %1173 = vmatprep.subr.mxu0 %v329
    %1174 = vmatpush1.msra.mxu0 %v328
    %1175 = vmatprep.subr.mxu0 0.0
    %1176 = vmatpush2.msra.mxu0 0.0
    %1177 = vmatprep.subr.mxu0 0.0
    %1178 = vmatpush2.msra.mxu0 0.0
    %1179 = vmatprep.subr.mxu0 0.0
    %1180 = vmatpush2.msra.mxu0 0.0
    %1181 = vmatprep.subr.mxu0 0.0
    %1182 = vmatpush2.msra.mxu0 0.0
    %1183 = vmatprep.subr.mxu0 0.0
    %1184 = vmatpush2.msra.mxu0 0.0
    %1185 = vmatprep.subr.mxu0 0.0
    %1186 = vmatpush2.msra.mxu0 0.0
    %1187 = vmatprep.subr.mxu0 0.0
    %1188 = vmatpush2.msra.mxu0 0.0
    %1189 = vmatprep.subr.mxu0 0.0
    %1190 = vmatpush2.msra.mxu0 0.0
    %1191 = vmatprep.subr.mxu0 0.0
    %1192 = vmatpush2.msra.mxu0 0.0
    %1193 = vmatprep.subr.mxu0 0.0
    %1194 = vmatpush2.msra.mxu0 0.0
    %1195 = vmatprep.subr.mxu0 0.0
    %1196 = vmatpush2.msra.mxu0 0.0
    %1197 = vmatprep.subr.mxu0 0.0
    %1198 = vmatpush2.msra.mxu0 0.0
    %1199 = vmatprep.subr.mxu0 0.0
    %1200 = vmatpush2.msra.mxu0 0.0
    %1201 = vmatprep.subr.mxu0 0.0
    %1202 = vmatpush2.msra.mxu0 0.0
    %1203 = vmatprep.subr.mxu0 0.0
    %1204 = vmatpush2.msra.mxu0 0.0
    %1205 = vmatprep.subr.mxu0 0.0
    %1206 = vmatpush2.msra.mxu0 0.0
    %1207 = vmatprep.mubr.f32.mxu0 0.0
    %1208 = vmatmul.mubr.f32.gmra.mxu0 %v1070
    %v1209 = vpop.f32.mrf.mxu0
    %v1210 = vadd.f32 %v1062, %v1209
    %v1211 = vpop.f32.mrf.mxu0
    %v1212 = vadd.f32 %v1066, %v1211
    %1213 = vdwg.mxu0
    %v1214 = vxor.u32 %v1139, 2147483648
    %v1215 = vmul.f32 %v1214, 1.442695
    %v1216 = vpow.pop %v1215
    %v1217 = vadd.f32 %v1216, 1.0
    %v1218 = vrcp.pop %v1217
    %v1219 = vmul.f32 1.0, %v1218
    %v1220 = vxor.u32 %v1141, 2147483648
    %v1221 = vmul.f32 %v1220, 1.442695
    %v1222 = vpow.pop %v1221
    %v1223 = vadd.f32 %v1222, 1.0
    %v1224 = vrcp.pop %v1223
    %v1225 = vmul.f32 1.0, %v1224
    %v1226 = vtanh.pop %v1210
    %v1227 = vxor.u32 %v1212, 2147483648
    %v1228 = vmul.f32 %v1227, 1.442695
    %v1229 = vpow.pop %v1228
    %v1230 = vadd.f32 %v1229, 1.0
    %v1231 = vrcp.pop %v1230
    %v1232 = vmul.f32 1.0, %v1231
    %v1233 = vmul.f32 %v1225, %v1055
    %v1234 = vmul.f32 %v1219, %v1226
    %v1235 = vadd.f32 %v1233, %v1234
    %v1236 = vtanh.pop %v1235
    %v1237 = vmul.f32 %v1232, %v1236
    %s1238 = scalar_lea.vmem [#allocation3], 16
    %1239 = vst.msk [vmem:[%s1238] sm:$0xf] %vm518, %v1237
    %s1240 = scalar_lea.vmem [#allocation2], 80
    %v1241 = vld [vmem:[%s1240] sm:$0xff]
    %v1242 = vld [vmem:[%s1240 + $0x8] sm:$0xff]
    %v1245 = vcombine.high %v1241, %v1241
    %v1246 = vcombine.high %v1242, %v1242
    %v1250 = vsel %vm348, %v1237, 0
    %1252 = vmatprep.subr.mxu0 0.0
    %1253 = vmatpush1.msra.mxu0 0.0
    %1254 = vmatprep.subr.mxu0 0.0
    %1255 = vmatpush1.msra.mxu0 0.0
    %1256 = vmatprep.subr.mxu0 0.0
    %1257 = vmatpush1.msra.mxu0 0.0
    %1258 = vmatprep.subr.mxu0 0.0
    %1259 = vmatpush1.msra.mxu0 0.0
    %1260 = vmatprep.subr.mxu0 0.0
    %1261 = vmatpush1.msra.mxu0 0.0
    %1262 = vmatprep.subr.mxu0 0.0
    %1263 = vmatpush1.msra.mxu0 0.0
    %1264 = vmatprep.subr.mxu0 0.0
    %1265 = vmatpush1.msra.mxu0 0.0
    %1266 = vmatprep.subr.mxu0 0.0
    %1267 = vmatpush1.msra.mxu0 0.0
    %1268 = vmatprep.subr.mxu0 0.0
    %1269 = vmatpush1.msra.mxu0 0.0
    %1270 = vmatprep.subr.mxu0 0.0
    %1271 = vmatpush1.msra.mxu0 0.0
    %1272 = vmatprep.subr.mxu0 0.0
    %1273 = vmatpush1.msra.mxu0 0.0
    %1274 = vmatprep.subr.mxu0 0.0
    %1275 = vmatpush1.msra.mxu0 0.0
    %1276 = vmatprep.subr.mxu0 0.0
    %1277 = vmatpush1.msra.mxu0 0.0
    %1278 = vmatprep.subr.mxu0 %v335
    %1279 = vmatpush1.msra.mxu0 %v334
    %1280 = vmatprep.subr.mxu0 %v331
    %1281 = vmatpush1.msra.mxu0 %v330
    %1282 = vmatprep.subr.mxu0 %v327
    %1283 = vmatpush1.msra.mxu0 %v326
    %1284 = vmatprep.subr.mxu0 0.0
    %1285 = vmatpush2.msra.mxu0 0.0
    %1286 = vmatprep.subr.mxu0 0.0
    %1287 = vmatpush2.msra.mxu0 0.0
    %1288 = vmatprep.subr.mxu0 0.0
    %1289 = vmatpush2.msra.mxu0 0.0
    %1290 = vmatprep.subr.mxu0 0.0
    %1291 = vmatpush2.msra.mxu0 0.0
    %1292 = vmatprep.subr.mxu0 0.0
    %1293 = vmatpush2.msra.mxu0 0.0
    %1294 = vmatprep.subr.mxu0 0.0
    %1295 = vmatpush2.msra.mxu0 0.0
    %1296 = vmatprep.subr.mxu0 0.0
    %1297 = vmatpush2.msra.mxu0 0.0
    %1298 = vmatprep.subr.mxu0 0.0
    %1299 = vmatpush2.msra.mxu0 0.0
    %1300 = vmatprep.subr.mxu0 0.0
    %1301 = vmatpush2.msra.mxu0 0.0
    %1302 = vmatprep.subr.mxu0 0.0
    %1303 = vmatpush2.msra.mxu0 0.0
    %1304 = vmatprep.subr.mxu0 0.0
    %1305 = vmatpush2.msra.mxu0 0.0
    %1306 = vmatprep.subr.mxu0 0.0
    %1307 = vmatpush2.msra.mxu0 0.0
    %1308 = vmatprep.subr.mxu0 0.0
    %1309 = vmatpush2.msra.mxu0 0.0
    %1310 = vmatprep.subr.mxu0 0.0
    %1311 = vmatpush2.msra.mxu0 0.0
    %1312 = vmatprep.subr.mxu0 0.0
    %1313 = vmatpush2.msra.mxu0 0.0
    %1314 = vmatprep.subr.mxu0 0.0
    %1315 = vmatpush2.msra.mxu0 0.0
    %1316 = vmatprep.mubr.f32.mxu0 0.0
    %1317 = vmatmul.mubr.f32.gmra.mxu0 %v1250
    %v1318 = vpop.f32.mrf.mxu0
    %v1319 = vadd.f32 %v1241, %v1318
    %v1320 = vpop.f32.mrf.mxu0
    %v1321 = vadd.f32 %v1245, %v1320
    %1322 = vdwg.mxu0
    %1323 = vmatprep.subr.mxu0 0.0
    %1324 = vmatpush1.msra.mxu0 0.0
    %1325 = vmatprep.subr.mxu0 0.0
    %1326 = vmatpush1.msra.mxu0 0.0
    %1327 = vmatprep.subr.mxu0 0.0
    %1328 = vmatpush1.msra.mxu0 0.0
    %1329 = vmatprep.subr.mxu0 0.0
    %1330 = vmatpush1.msra.mxu0 0.0
    %1331 = vmatprep.subr.mxu0 0.0
    %1332 = vmatpush1.msra.mxu0 0.0
    %1333 = vmatprep.subr.mxu0 0.0
    %1334 = vmatpush1.msra.mxu0 0.0
    %1335 = vmatprep.subr.mxu0 0.0
    %1336 = vmatpush1.msra.mxu0 0.0
    %1337 = vmatprep.subr.mxu0 0.0
    %1338 = vmatpush1.msra.mxu0 0.0
    %1339 = vmatprep.subr.mxu0 0.0
    %1340 = vmatpush1.msra.mxu0 0.0
    %1341 = vmatprep.subr.mxu0 0.0
    %1342 = vmatpush1.msra.mxu0 0.0
    %1343 = vmatprep.subr.mxu0 0.0
    %1344 = vmatpush1.msra.mxu0 0.0
    %1345 = vmatprep.subr.mxu0 0.0
    %1346 = vmatpush1.msra.mxu0 0.0
    %1347 = vmatprep.subr.mxu0 0.0
    %1348 = vmatpush1.msra.mxu0 0.0
    %1349 = vmatprep.subr.mxu0 %v337
    %1350 = vmatpush1.msra.mxu0 %v336
    %1351 = vmatprep.subr.mxu0 %v333
    %1352 = vmatpush1.msra.mxu0 %v332
    %1353 = vmatprep.subr.mxu0 %v329
    %1354 = vmatpush1.msra.mxu0 %v328
    %1355 = vmatprep.subr.mxu0 0.0
    %1356 = vmatpush2.msra.mxu0 0.0
    %1357 = vmatprep.subr.mxu0 0.0
    %1358 = vmatpush2.msra.mxu0 0.0
    %1359 = vmatprep.subr.mxu0 0.0
    %1360 = vmatpush2.msra.mxu0 0.0
    %1361 = vmatprep.subr.mxu0 0.0
    %1362 = vmatpush2.msra.mxu0 0.0
    %1363 = vmatprep.subr.mxu0 0.0
    %1364 = vmatpush2.msra.mxu0 0.0
    %1365 = vmatprep.subr.mxu0 0.0
    %1366 = vmatpush2.msra.mxu0 0.0
    %1367 = vmatprep.subr.mxu0 0.0
    %1368 = vmatpush2.msra.mxu0 0.0
    %1369 = vmatprep.subr.mxu0 0.0
    %1370 = vmatpush2.msra.mxu0 0.0
    %1371 = vmatprep.subr.mxu0 0.0
    %1372 = vmatpush2.msra.mxu0 0.0
    %1373 = vmatprep.subr.mxu0 0.0
    %1374 = vmatpush2.msra.mxu0 0.0
    %1375 = vmatprep.subr.mxu0 0.0
    %1376 = vmatpush2.msra.mxu0 0.0
    %1377 = vmatprep.subr.mxu0 0.0
    %1378 = vmatpush2.msra.mxu0 0.0
    %1379 = vmatprep.subr.mxu0 0.0
    %1380 = vmatpush2.msra.mxu0 0.0
    %1381 = vmatprep.subr.mxu0 0.0
    %1382 = vmatpush2.msra.mxu0 0.0
    %1383 = vmatprep.subr.mxu0 0.0
    %1384 = vmatpush2.msra.mxu0 0.0
    %1385 = vmatprep.subr.mxu0 0.0
    %1386 = vmatpush2.msra.mxu0 0.0
    %1387 = vmatprep.mubr.f32.mxu0 0.0
    %1388 = vmatmul.mubr.f32.gmra.mxu0 %v1250
    %v1389 = vpop.f32.mrf.mxu0
    %v1390 = vadd.f32 %v1242, %v1389
    %v1391 = vpop.f32.mrf.mxu0
    %v1392 = vadd.f32 %v1246, %v1391
    %1393 = vdwg.mxu0
    %v1394 = vxor.u32 %v1319, 2147483648
    %v1395 = vmul.f32 %v1394, 1.442695
    %v1396 = vpow.pop %v1395
    %v1397 = vadd.f32 %v1396, 1.0
    %v1398 = vrcp.pop %v1397
    %v1399 = vmul.f32 1.0, %v1398
    %v1400 = vxor.u32 %v1321, 2147483648
    %v1401 = vmul.f32 %v1400, 1.442695
    %v1402 = vpow.pop %v1401
    %v1403 = vadd.f32 %v1402, 1.0
    %v1404 = vrcp.pop %v1403
    %v1405 = vmul.f32 1.0, %v1404
    %v1406 = vtanh.pop %v1390
    %v1407 = vxor.u32 %v1392, 2147483648
    %v1408 = vmul.f32 %v1407, 1.442695
    %v1409 = vpow.pop %v1408
    %v1410 = vadd.f32 %v1409, 1.0
    %v1411 = vrcp.pop %v1410
    %v1412 = vmul.f32 1.0, %v1411
    %v1413 = vmul.f32 %v1405, %v1235
    %v1414 = vmul.f32 %v1399, %v1406
    %v1415 = vadd.f32 %v1413, %v1414
    %v1416 = vtanh.pop %v1415
    %v1417 = vmul.f32 %v1412, %v1416
    %s1418 = scalar_lea.vmem [#allocation3], 20
    %1419 = vst.msk [vmem:[%s1418] sm:$0xf] %vm518, %v1417
    %s1420 = scalar_lea.vmem [#allocation2], 96
    %v1421 = vld [vmem:[%s1420] sm:$0xff]
    %v1422 = vld [vmem:[%s1420 + $0x8] sm:$0xff]
    %v1425 = vcombine.high %v1421, %v1421
    %v1426 = vcombine.high %v1422, %v1422
    %v1430 = vsel %vm348, %v1417, 0
    %1432 = vmatprep.subr.mxu0 0.0
    %1433 = vmatpush1.msra.mxu0 0.0
    %1434 = vmatprep.subr.mxu0 0.0
    %1435 = vmatpush1.msra.mxu0 0.0
    %1436 = vmatprep.subr.mxu0 0.0
    %1437 = vmatpush1.msra.mxu0 0.0
    %1438 = vmatprep.subr.mxu0 0.0
    %1439 = vmatpush1.msra.mxu0 0.0
    %1440 = vmatprep.subr.mxu0 0.0
    %1441 = vmatpush1.msra.mxu0 0.0
    %1442 = vmatprep.subr.mxu0 0.0
    %1443 = vmatpush1.msra.mxu0 0.0
    %1444 = vmatprep.subr.mxu0 0.0
    %1445 = vmatpush1.msra.mxu0 0.0
    %1446 = vmatprep.subr.mxu0 0.0
    %1447 = vmatpush1.msra.mxu0 0.0
    %1448 = vmatprep.subr.mxu0 0.0
    %1449 = vmatpush1.msra.mxu0 0.0
    %1450 = vmatprep.subr.mxu0 0.0
    %1451 = vmatpush1.msra.mxu0 0.0
    %1452 = vmatprep.subr.mxu0 0.0
    %1453 = vmatpush1.msra.mxu0 0.0
    %1454 = vmatprep.subr.mxu0 0.0
    %1455 = vmatpush1.msra.mxu0 0.0
    %1456 = vmatprep.subr.mxu0 0.0
    %1457 = vmatpush1.msra.mxu0 0.0
    %1458 = vmatprep.subr.mxu0 %v335
    %1459 = vmatpush1.msra.mxu0 %v334
    %1460 = vmatprep.subr.mxu0 %v331
    %1461 = vmatpush1.msra.mxu0 %v330
    %1462 = vmatprep.subr.mxu0 %v327
    %1463 = vmatpush1.msra.mxu0 %v326
    %1464 = vmatprep.subr.mxu0 0.0
    %1465 = vmatpush2.msra.mxu0 0.0
    %1466 = vmatprep.subr.mxu0 0.0
    %1467 = vmatpush2.msra.mxu0 0.0
    %1468 = vmatprep.subr.mxu0 0.0
    %1469 = vmatpush2.msra.mxu0 0.0
    %1470 = vmatprep.subr.mxu0 0.0
    %1471 = vmatpush2.msra.mxu0 0.0
    %1472 = vmatprep.subr.mxu0 0.0
    %1473 = vmatpush2.msra.mxu0 0.0
    %1474 = vmatprep.subr.mxu0 0.0
    %1475 = vmatpush2.msra.mxu0 0.0
    %1476 = vmatprep.subr.mxu0 0.0
    %1477 = vmatpush2.msra.mxu0 0.0
    %1478 = vmatprep.subr.mxu0 0.0
    %1479 = vmatpush2.msra.mxu0 0.0
    %1480 = vmatprep.subr.mxu0 0.0
    %1481 = vmatpush2.msra.mxu0 0.0
    %1482 = vmatprep.subr.mxu0 0.0
    %1483 = vmatpush2.msra.mxu0 0.0
    %1484 = vmatprep.subr.mxu0 0.0
    %1485 = vmatpush2.msra.mxu0 0.0
    %1486 = vmatprep.subr.mxu0 0.0
    %1487 = vmatpush2.msra.mxu0 0.0
    %1488 = vmatprep.subr.mxu0 0.0
    %1489 = vmatpush2.msra.mxu0 0.0
    %1490 = vmatprep.subr.mxu0 0.0
    %1491 = vmatpush2.msra.mxu0 0.0
    %1492 = vmatprep.subr.mxu0 0.0
    %1493 = vmatpush2.msra.mxu0 0.0
    %1494 = vmatprep.subr.mxu0 0.0
    %1495 = vmatpush2.msra.mxu0 0.0
    %1496 = vmatprep.mubr.f32.mxu0 0.0
    %1497 = vmatmul.mubr.f32.gmra.mxu0 %v1430
    %v1498 = vpop.f32.mrf.mxu0
    %v1499 = vadd.f32 %v1421, %v1498
    %v1500 = vpop.f32.mrf.mxu0
    %v1501 = vadd.f32 %v1425, %v1500
    %1502 = vdwg.mxu0
    %1503 = vmatprep.subr.mxu0 0.0
    %1504 = vmatpush1.msra.mxu0 0.0
    %1505 = vmatprep.subr.mxu0 0.0
    %1506 = vmatpush1.msra.mxu0 0.0
    %1507 = vmatprep.subr.mxu0 0.0
    %1508 = vmatpush1.msra.mxu0 0.0
    %1509 = vmatprep.subr.mxu0 0.0
    %1510 = vmatpush1.msra.mxu0 0.0
    %1511 = vmatprep.subr.mxu0 0.0
    %1512 = vmatpush1.msra.mxu0 0.0
    %1513 = vmatprep.subr.mxu0 0.0
    %1514 = vmatpush1.msra.mxu0 0.0
    %1515 = vmatprep.subr.mxu0 0.0
    %1516 = vmatpush1.msra.mxu0 0.0
    %1517 = vmatprep.subr.mxu0 0.0
    %1518 = vmatpush1.msra.mxu0 0.0
    %1519 = vmatprep.subr.mxu0 0.0
    %1520 = vmatpush1.msra.mxu0 0.0
    %1521 = vmatprep.subr.mxu0 0.0
    %1522 = vmatpush1.msra.mxu0 0.0
    %1523 = vmatprep.subr.mxu0 0.0
    %1524 = vmatpush1.msra.mxu0 0.0
    %1525 = vmatprep.subr.mxu0 0.0
    %1526 = vmatpush1.msra.mxu0 0.0
    %1527 = vmatprep.subr.mxu0 0.0
    %1528 = vmatpush1.msra.mxu0 0.0
    %1529 = vmatprep.subr.mxu0 %v337
    %1530 = vmatpush1.msra.mxu0 %v336
    %1531 = vmatprep.subr.mxu0 %v333
    %1532 = vmatpush1.msra.mxu0 %v332
    %1533 = vmatprep.subr.mxu0 %v329
    %1534 = vmatpush1.msra.mxu0 %v328
    %1535 = vmatprep.subr.mxu0 0.0
    %1536 = vmatpush2.msra.mxu0 0.0
    %1537 = vmatprep.subr.mxu0 0.0
    %1538 = vmatpush2.msra.mxu0 0.0
    %1539 = vmatprep.subr.mxu0 0.0
    %1540 = vmatpush2.msra.mxu0 0.0
    %1541 = vmatprep.subr.mxu0 0.0
    %1542 = vmatpush2.msra.mxu0 0.0
    %1543 = vmatprep.subr.mxu0 0.0
    %1544 = vmatpush2.msra.mxu0 0.0
    %1545 = vmatprep.subr.mxu0 0.0
    %1546 = vmatpush2.msra.mxu0 0.0
    %1547 = vmatprep.subr.mxu0 0.0
    %1548 = vmatpush2.msra.mxu0 0.0
    %1549 = vmatprep.subr.mxu0 0.0
    %1550 = vmatpush2.msra.mxu0 0.0
    %1551 = vmatprep.subr.mxu0 0.0
    %1552 = vmatpush2.msra.mxu0 0.0
    %1553 = vmatprep.subr.mxu0 0.0
    %1554 = vmatpush2.msra.mxu0 0.0
    %1555 = vmatprep.subr.mxu0 0.0
    %1556 = vmatpush2.msra.mxu0 0.0
    %1557 = vmatprep.subr.mxu0 0.0
    %1558 = vmatpush2.msra.mxu0 0.0
    %1559 = vmatprep.subr.mxu0 0.0
    %1560 = vmatpush2.msra.mxu0 0.0
    %1561 = vmatprep.subr.mxu0 0.0
    %1562 = vmatpush2.msra.mxu0 0.0
    %1563 = vmatprep.subr.mxu0 0.0
    %1564 = vmatpush2.msra.mxu0 0.0
    %1565 = vmatprep.subr.mxu0 0.0
    %1566 = vmatpush2.msra.mxu0 0.0
    %1567 = vmatprep.mubr.f32.mxu0 0.0
    %1568 = vmatmul.mubr.f32.gmra.mxu0 %v1430
    %v1569 = vpop.f32.mrf.mxu0
    %v1570 = vadd.f32 %v1422, %v1569
    %v1571 = vpop.f32.mrf.mxu0
    %v1572 = vadd.f32 %v1426, %v1571
    %1573 = vdwg.mxu0
    %v1574 = vxor.u32 %v1499, 2147483648
    %v1575 = vmul.f32 %v1574, 1.442695
    %v1576 = vpow.pop %v1575
    %v1577 = vadd.f32 %v1576, 1.0
    %v1578 = vrcp.pop %v1577
    %v1579 = vmul.f32 1.0, %v1578
    %v1580 = vxor.u32 %v1501, 2147483648
    %v1581 = vmul.f32 %v1580, 1.442695
    %v1582 = vpow.pop %v1581
    %v1583 = vadd.f32 %v1582, 1.0
    %v1584 = vrcp.pop %v1583
    %v1585 = vmul.f32 1.0, %v1584
    %v1586 = vtanh.pop %v1570
    %v1587 = vxor.u32 %v1572, 2147483648
    %v1588 = vmul.f32 %v1587, 1.442695
    %v1589 = vpow.pop %v1588
    %v1590 = vadd.f32 %v1589, 1.0
    %v1591 = vrcp.pop %v1590
    %v1592 = vmul.f32 1.0, %v1591
    %v1593 = vmul.f32 %v1585, %v1415
    %v1594 = vmul.f32 %v1579, %v1586
    %v1595 = vadd.f32 %v1593, %v1594
    %v1596 = vtanh.pop %v1595
    %v1597 = vmul.f32 %v1592, %v1596
    %s1598 = scalar_lea.vmem [#allocation3], 24
    %1599 = vst.msk [vmem:[%s1598] sm:$0xf] %vm518, %v1597
    %s1600 = scalar_lea.vmem [#allocation2], 112
    %v1601 = vld [vmem:[%s1600] sm:$0xff]
    %v1602 = vld [vmem:[%s1600 + $0x8] sm:$0xff]
    %v1605 = vcombine.high %v1601, %v1601
    %v1606 = vcombine.high %v1602, %v1602
    %v1610 = vsel %vm348, %v1597, 0
    %1612 = vmatprep.subr.mxu0 0.0
    %1613 = vmatpush1.msra.mxu0 0.0
    %1614 = vmatprep.subr.mxu0 0.0
    %1615 = vmatpush1.msra.mxu0 0.0
    %1616 = vmatprep.subr.mxu0 0.0
    %1617 = vmatpush1.msra.mxu0 0.0
    %1618 = vmatprep.subr.mxu0 0.0
    %1619 = vmatpush1.msra.mxu0 0.0
    %1620 = vmatprep.subr.mxu0 0.0
    %1621 = vmatpush1.msra.mxu0 0.0
    %1622 = vmatprep.subr.mxu0 0.0
    %1623 = vmatpush1.msra.mxu0 0.0
    %1624 = vmatprep.subr.mxu0 0.0
    %1625 = vmatpush1.msra.mxu0 0.0
    %1626 = vmatprep.subr.mxu0 0.0
    %1627 = vmatpush1.msra.mxu0 0.0
    %1628 = vmatprep.subr.mxu0 0.0
    %1629 = vmatpush1.msra.mxu0 0.0
    %1630 = vmatprep.subr.mxu0 0.0
    %1631 = vmatpush1.msra.mxu0 0.0
    %1632 = vmatprep.subr.mxu0 0.0
    %1633 = vmatpush1.msra.mxu0 0.0
    %1634 = vmatprep.subr.mxu0 0.0
    %1635 = vmatpush1.msra.mxu0 0.0
    %1636 = vmatprep.subr.mxu0 0.0
    %1637 = vmatpush1.msra.mxu0 0.0
    %1638 = vmatprep.subr.mxu0 %v335
    %1639 = vmatpush1.msra.mxu0 %v334
    %1640 = vmatprep.subr.mxu0 %v331
    %1641 = vmatpush1.msra.mxu0 %v330
    %1642 = vmatprep.subr.mxu0 %v327
    %1643 = vmatpush1.msra.mxu0 %v326
    %1644 = vmatprep.subr.mxu0 0.0
    %1645 = vmatpush2.msra.mxu0 0.0
    %1646 = vmatprep.subr.mxu0 0.0
    %1647 = vmatpush2.msra.mxu0 0.0
    %1648 = vmatprep.subr.mxu0 0.0
    %1649 = vmatpush2.msra.mxu0 0.0
    %1650 = vmatprep.subr.mxu0 0.0
    %1651 = vmatpush2.msra.mxu0 0.0
    %1652 = vmatprep.subr.mxu0 0.0
    %1653 = vmatpush2.msra.mxu0 0.0
    %1654 = vmatprep.subr.mxu0 0.0
    %1655 = vmatpush2.msra.mxu0 0.0
    %1656 = vmatprep.subr.mxu0 0.0
    %1657 = vmatpush2.msra.mxu0 0.0
    %1658 = vmatprep.subr.mxu0 0.0
    %1659 = vmatpush2.msra.mxu0 0.0
    %1660 = vmatprep.subr.mxu0 0.0
    %1661 = vmatpush2.msra.mxu0 0.0
    %1662 = vmatprep.subr.mxu0 0.0
    %1663 = vmatpush2.msra.mxu0 0.0
    %1664 = vmatprep.subr.mxu0 0.0
    %1665 = vmatpush2.msra.mxu0 0.0
    %1666 = vmatprep.subr.mxu0 0.0
    %1667 = vmatpush2.msra.mxu0 0.0
    %1668 = vmatprep.subr.mxu0 0.0
    %1669 = vmatpush2.msra.mxu0 0.0
    %1670 = vmatprep.subr.mxu0 0.0
    %1671 = vmatpush2.msra.mxu0 0.0
    %1672 = vmatprep.subr.mxu0 0.0
    %1673 = vmatpush2.msra.mxu0 0.0
    %1674 = vmatprep.subr.mxu0 0.0
    %1675 = vmatpush2.msra.mxu0 0.0
    %1676 = vmatprep.mubr.f32.mxu0 0.0
    %1677 = vmatmul.mubr.f32.gmra.mxu0 %v1610
    %v1678 = vpop.f32.mrf.mxu0
    %v1679 = vadd.f32 %v1601, %v1678
    %v1680 = vpop.f32.mrf.mxu0
    %v1681 = vadd.f32 %v1605, %v1680
    %1682 = vdwg.mxu0
    %1683 = vmatprep.subr.mxu0 0.0
    %1684 = vmatpush1.msra.mxu0 0.0
    %1685 = vmatprep.subr.mxu0 0.0
    %1686 = vmatpush1.msra.mxu0 0.0
    %1687 = vmatprep.subr.mxu0 0.0
    %1688 = vmatpush1.msra.mxu0 0.0
    %1689 = vmatprep.subr.mxu0 0.0
    %1690 = vmatpush1.msra.mxu0 0.0
    %1691 = vmatprep.subr.mxu0 0.0
    %1692 = vmatpush1.msra.mxu0 0.0
    %1693 = vmatprep.subr.mxu0 0.0
    %1694 = vmatpush1.msra.mxu0 0.0
    %1695 = vmatprep.subr.mxu0 0.0
    %1696 = vmatpush1.msra.mxu0 0.0
    %1697 = vmatprep.subr.mxu0 0.0
    %1698 = vmatpush1.msra.mxu0 0.0
    %1699 = vmatprep.subr.mxu0 0.0
    %1700 = vmatpush1.msra.mxu0 0.0
    %1701 = vmatprep.subr.mxu0 0.0
    %1702 = vmatpush1.msra.mxu0 0.0
    %1703 = vmatprep.subr.mxu0 0.0
    %1704 = vmatpush1.msra.mxu0 0.0
    %1705 = vmatprep.subr.mxu0 0.0
    %1706 = vmatpush1.msra.mxu0 0.0
    %1707 = vmatprep.subr.mxu0 0.0
    %1708 = vmatpush1.msra.mxu0 0.0
    %1709 = vmatprep.subr.mxu0 %v337
    %1710 = vmatpush1.msra.mxu0 %v336
    %1711 = vmatprep.subr.mxu0 %v333
    %1712 = vmatpush1.msra.mxu0 %v332
    %1713 = vmatprep.subr.mxu0 %v329
    %1714 = vmatpush1.msra.mxu0 %v328
    %1715 = vmatprep.subr.mxu0 0.0
    %1716 = vmatpush2.msra.mxu0 0.0
    %1717 = vmatprep.subr.mxu0 0.0
    %1718 = vmatpush2.msra.mxu0 0.0
    %1719 = vmatprep.subr.mxu0 0.0
    %1720 = vmatpush2.msra.mxu0 0.0
    %1721 = vmatprep.subr.mxu0 0.0
    %1722 = vmatpush2.msra.mxu0 0.0
    %1723 = vmatprep.subr.mxu0 0.0
    %1724 = vmatpush2.msra.mxu0 0.0
    %1725 = vmatprep.subr.mxu0 0.0
    %1726 = vmatpush2.msra.mxu0 0.0
    %1727 = vmatprep.subr.mxu0 0.0
    %1728 = vmatpush2.msra.mxu0 0.0
    %1729 = vmatprep.subr.mxu0 0.0
    %1730 = vmatpush2.msra.mxu0 0.0
    %1731 = vmatprep.subr.mxu0 0.0
    %1732 = vmatpush2.msra.mxu0 0.0
    %1733 = vmatprep.subr.mxu0 0.0
    %1734 = vmatpush2.msra.mxu0 0.0
    %1735 = vmatprep.subr.mxu0 0.0
    %1736 = vmatpush2.msra.mxu0 0.0
    %1737 = vmatprep.subr.mxu0 0.0
    %1738 = vmatpush2.msra.mxu0 0.0
    %1739 = vmatprep.subr.mxu0 0.0
    %1740 = vmatpush2.msra.mxu0 0.0
    %1741 = vmatprep.subr.mxu0 0.0
    %1742 = vmatpush2.msra.mxu0 0.0
    %1743 = vmatprep.subr.mxu0 0.0
    %1744 = vmatpush2.msra.mxu0 0.0
    %1745 = vmatprep.subr.mxu0 0.0
    %1746 = vmatpush2.msra.mxu0 0.0
    %1747 = vmatprep.mubr.f32.mxu0 0.0
    %1748 = vmatmul.mubr.f32.gmra.mxu0 %v1610
    %v1749 = vpop.f32.mrf.mxu0
    %v1750 = vadd.f32 %v1602, %v1749
    %v1751 = vpop.f32.mrf.mxu0
    %v1752 = vadd.f32 %v1606, %v1751
    %1753 = vdwg.mxu0
    %v1754 = vxor.u32 %v1679, 2147483648
    %v1755 = vmul.f32 %v1754, 1.442695
    %v1756 = vpow.pop %v1755
    %v1757 = vadd.f32 %v1756, 1.0
    %v1758 = vrcp.pop %v1757
    %v1759 = vmul.f32 1.0, %v1758
    %v1760 = vxor.u32 %v1681, 2147483648
    %v1761 = vmul.f32 %v1760, 1.442695
    %v1762 = vpow.pop %v1761
    %v1763 = vadd.f32 %v1762, 1.0
    %v1764 = vrcp.pop %v1763
    %v1765 = vmul.f32 1.0, %v1764
    %v1766 = vtanh.pop %v1750
    %v1767 = vxor.u32 %v1752, 2147483648
    %v1768 = vmul.f32 %v1767, 1.442695
    %v1769 = vpow.pop %v1768
    %v1770 = vadd.f32 %v1769, 1.0
    %v1771 = vrcp.pop %v1770
    %v1772 = vmul.f32 1.0, %v1771
    %v1773 = vmul.f32 %v1765, %v1595
    %v1774 = vmul.f32 %v1759, %v1766
    %v1775 = vadd.f32 %v1773, %v1774
    %v1776 = vtanh.pop %v1775
    %v1777 = vmul.f32 %v1772, %v1776
    %s1778 = scalar_lea.vmem [#allocation3], 28
    %1779 = vst.msk [vmem:[%s1778] sm:$0xf] %vm518, %v1777
    %1780 = vst.msk [vmem:[#allocation4] sm:$0xf] %vm518, %v1777
    %1781 = vst.msk [vmem:[#allocation5] sm:$0xf] %vm518, %v1775
    %1782 = vst.msk [vmem:[#allocation9] sm:$0xf] %vm518, %v1777
    %1783 = vst.msk [vmem:[#allocation10] sm:$0xf] %vm518, %v1775
    %v1784 = vld [vmem:[%s3] sm:$0x1]
    %v1785 = vld [vmem:[#allocation3] sm:$0xf]
    %v1786 = vld [vmem:[#allocation3 + $0x4] sm:$0xf]
    %v1787 = vld [vmem:[#allocation3 + $0x8] sm:$0xf]
    %v1788 = vld [vmem:[#allocation3 + $0xc] sm:$0xf]
    %v1789 = vld [vmem:[#allocation3 + $0x10] sm:$0xf]
    %v1790 = vld [vmem:[#allocation3 + $0x14] sm:$0xf]
    %v1791 = vld [vmem:[#allocation3 + $0x18] sm:$0xf]
    %v1792 = vld [vmem:[#allocation3 + $0x1c] sm:$0xf]
    %v1794 = vlaneseq
    %v1795 = vshrl.u32 %v1794, 7
    %v1796 = vsub.s32 0, %v1795
    %v1797 = vrot.slane %v1784, %v1796
    %v1799 = vmul.f32 %v1785, %v1797
    %v1800 = vmul.f32 %v1786, %v1797
    %v1801 = vmul.f32 %v1787, %v1797
    %v1802 = vmul.f32 %v1788, %v1797
    %v1803 = vmul.f32 %v1789, %v1797
    %v1804 = vmul.f32 %v1790, %v1797
    %v1805 = vmul.f32 %v1791, %v1797
    %v1806 = vmul.f32 %v1792, %v1797
    %v1807 = vsel %vm518, %v1799, 0.0
    %1808 = vadd.xlane.f32.xlu0 %v1807
    %v1809 = vpop.xlane.xlu0 %1808
    %v1810 = vsel %vm518, %v1800, 0.0
    %1811 = vadd.xlane.f32.xlu0 %v1810
    %v1812 = vpop.xlane.xlu0 %1811
    %v1813 = vsel %vm518, %v1801, 0.0
    %1814 = vadd.xlane.f32.xlu0 %v1813
    %v1815 = vpop.xlane.xlu0 %1814
    %v1816 = vsel %vm518, %v1802, 0.0
    %1817 = vadd.xlane.f32.xlu0 %v1816
    %v1818 = vpop.xlane.xlu0 %1817
    %v1819 = vsel %vm518, %v1803, 0.0
    %1820 = vadd.xlane.f32.xlu0 %v1819
    %v1821 = vpop.xlane.xlu0 %1820
    %v1822 = vsel %vm518, %v1804, 0.0
    %1823 = vadd.xlane.f32.xlu0 %v1822
    %v1824 = vpop.xlane.xlu0 %1823
    %v1825 = vsel %vm518, %v1805, 0.0
    %1826 = vadd.xlane.f32.xlu0 %v1825
    %v1827 = vpop.xlane.xlu0 %1826
    %v1828 = vsel %vm518, %v1806, 0.0
    %1829 = vadd.xlane.f32.xlu0 %v1828
    %v1830 = vpop.xlane.xlu0 %1829
    %1831 = vset.pattern.permute.xlu0 24
    %1832 = vperm.xlu0 %1831, %v1797
    %v1833 = vpop.permute.xlu0 %1832
    %v1835 = vadd.f32 %v1809, %v1833
    %v1836 = vadd.f32 %v1812, %v1833
    %v1837 = vadd.f32 %v1815, %v1833
    %v1838 = vadd.f32 %v1818, %v1833
    %v1839 = vadd.f32 %v1821, %v1833
    %v1840 = vadd.f32 %v1824, %v1833
    %v1841 = vadd.f32 %v1827, %v1833
    %v1842 = vadd.f32 %v1830, %v1833
    %v1851 = vlaneseq
    %v1852 = vand.u32 %v1851, 127
    %v1853 = vlaneseq
    %v1854 = vshrl.u32 %v1853, 7
    %v1855 = vsub.s32 %v1852, %v1854
    %v1856 = vrot.slane %v1835, %v1855
    %v1857 = vlaneseq
    %v1858 = vshrl.u32 %v1857, 7
    %v1859 = vsub.s32 %v1852, %v1858
    %v1860 = vrot.slane %v1836, %v1859
    %v1861 = vlaneseq
    %v1862 = vshrl.u32 %v1861, 7
    %v1863 = vsub.s32 %v1852, %v1862
    %v1864 = vrot.slane %v1837, %v1863
    %v1865 = vlaneseq
    %v1866 = vshrl.u32 %v1865, 7
    %v1867 = vsub.s32 %v1852, %v1866
    %v1868 = vrot.slane %v1838, %v1867
    %v1869 = vlaneseq
    %v1870 = vshrl.u32 %v1869, 7
    %v1871 = vsub.s32 %v1852, %v1870
    %v1872 = vrot.slane %v1839, %v1871
    %v1873 = vlaneseq
    %v1874 = vshrl.u32 %v1873, 7
    %v1875 = vsub.s32 %v1852, %v1874
    %v1876 = vrot.slane %v1840, %v1875
    %v1877 = vlaneseq
    %v1878 = vshrl.u32 %v1877, 7
    %v1879 = vsub.s32 %v1852, %v1878
    %v1880 = vrot.slane %v1841, %v1879
    %v1881 = vlaneseq
    %v1882 = vshrl.u32 %v1881, 7
    %v1883 = vsub.s32 %v1852, %v1882
    %v1884 = vrot.slane %v1842, %v1883
    %vm1885 = vcmask 1041409
    %v1886 = vsel %vm1885, %v1860, %v1856
    %vm1887 = vcmask 1042434
    %v1888 = vsel %vm1887, %v1864, %v1886
    %vm1889 = vcmask 1043459
    %v1890 = vsel %vm1889, %v1868, %v1888
    %vm1891 = vcmask 1044484
    %v1892 = vsel %vm1891, %v1872, %v1890
    %vm1893 = vcmask 1045509
    %v1894 = vsel %vm1893, %v1876, %v1892
    %vm1895 = vcmask 1046534
    %v1896 = vsel %vm1895, %v1880, %v1894
    %vm1897 = vcmask 1047559
    %v1898 = vsel %vm1897, %v1884, %v1896
    %v1900 = vmul.f32 %v51, %v1898
    %vm1901 = vcmask 31744
    %1902 = vst.msk [vmem:[%s6] sm:$0xff] %vm1901, %v1900
    // Predicated region
    $region34: #{tpu_custom_call.1} parent=1 // pred_check
      _
    $region35: #{tpu_custom_call.1} parent=1 // pred_check_branch
      %1904 = sbr.rel (0) target = $region37
    $region36: #{tpu_custom_call.1} parent=1 // pred_region
      _
    $region37: #{tpu_custom_call.1} parent=1 // pred_fallthru
      _
    // Predicated region
    $region38: #{tpu_custom_call.1} parent=1 // pred_check
      _
    $region39: #{tpu_custom_call.1} parent=1 // pred_check_branch
      %1906 = sbr.rel (0) target = $region41
    $region40: #{tpu_custom_call.1} parent=1 // pred_region
      %s1908 = ssub.s32 64, 64
      %1909 = vsyncadd [#allocation8], %s1908
      %s1911 = sshll.u32 [#allocation9], 4
      %s1912 = int_to_ptr.vmem [resolvable:$true] %s1911
      %1914 = dma.vmem_to_hbm [thread:$0]  %s1912, 64, %s7, [#allocation8]
    $region41: #{tpu_custom_call.1} parent=1 // pred_fallthru
      _
    // Predicated region
    $region42: #{tpu_custom_call.1} parent=1 // pred_check
      _
    $region43: #{tpu_custom_call.1} parent=1 // pred_check_branch
      %1916 = sbr.rel (0) target = $region45
    $region44: #{tpu_custom_call.1} parent=1 // pred_region
      %s1918 = ssub.s32 64, 64
      %1919 = vsyncadd [#allocation11], %s1918
      %s1921 = sshll.u32 [#allocation10], 4
      %s1922 = int_to_ptr.vmem [resolvable:$true] %s1921
      %1924 = dma.vmem_to_hbm [thread:$0]  %s1922, 64, %s8, [#allocation11]
    $region45: #{tpu_custom_call.1} parent=1 // pred_fallthru
      _
    // Predicated region
    $region46: #{tpu_custom_call.1} parent=1 // pred_check
      _
    $region47: #{tpu_custom_call.1} parent=1 // pred_check_branch
      %1926 = sbr.rel (0) target = $region49
    $region48: #{tpu_custom_call.1} parent=1 // pred_region
      _
    $region49: #{tpu_custom_call.1} parent=1 // pred_fallthru
      _
    // Predicated region
    $region50: #{tpu_custom_call.1} parent=1 // pred_check
      _
    $region51: #{tpu_custom_call.1} parent=1 // pred_check_branch
      %1928 = sbr.rel (0) target = $region53
    $region52: #{tpu_custom_call.1} parent=1 // pred_region
      %1929 = dma.done [#allocation8], 64
    $region53: #{tpu_custom_call.1} parent=1 // pred_fallthru
      _
    // Predicated region
    $region54: #{tpu_custom_call.1} parent=1 // pred_check
      _
    $region55: #{tpu_custom_call.1} parent=1 // pred_check_branch
      %1931 = sbr.rel (0) target = $region57
    $region56: #{tpu_custom_call.1} parent=1 // pred_region
      %1932 = dma.done [#allocation11], 64
    $region57: #{tpu_custom_call.1} parent=1 // pred_fallthru
      _
    %1933 = vsyncpa [#allocation7], 1
    %1934 = vsyncpa [#allocation8], 1
    %1935 = vsyncpa [#allocation11], 1

</llo_original>
